<compile_context>
chip_gen: v7x
topology: tpu7x:2x2x1
jax: 0.10.0
libtpu: 0.0.40
codegen_flags: <defaults>
</compile_context>

<pallas_src>
import functools

import numpy as np
import jax
import jax.numpy as jnp
from jax.experimental import pallas as pl
from jax.experimental.pallas import tpu as pltpu

_NSTATS = 6        # columns: [ce = -p*log(max(q,1e-5)), p*q, q, p, p*q_bin, q_bin]
_LANES = 128
_TSUB_TARGET = 512  # 512 sublanes x 128 lanes = 64K f32 per channel per grid step


def _tree_fold_rows(x, rows):
    """Sum groups of `rows` sublanes: (C, T, L) -> (C, rows, L), T % rows == 0.

    Balanced tree of static-slice VPU adds: no reshapes, no cross-lane ops."""
    n = x.shape[1] // rows
    parts = [x[:, k * rows:(k + 1) * rows, :] for k in range(n)]
    while len(parts) > 1:
        nxt = [parts[i] + parts[i + 1] for i in range(0, len(parts) - 1, 2)]
        if len(parts) % 2:
            nxt.append(parts[-1])
        parts = nxt
    return parts[0]


def _stats_kernel(q_ref, p_ref, out_ref, acc_ref, *, msub, tsub, acc_rows):
    """Accumulate the six per-channel statistics over the flattened spatial axis.

    q_ref, p_ref : (C, TSUB, 128) tiles (batch dim squeezed by the BlockSpec)
    out_ref      : (C, _NSTATS) per-batch output block (written on last step)
    acc_ref      : (_NSTATS, C, acc_rows, 128) lane-dense VMEM accumulator
    """
    i = pl.program_id(1)

    @pl.when(i == 0)
    def _():
        acc_ref[...] = jnp.zeros_like(acc_ref)

    q = q_ref[...].astype(jnp.float32)
    p = p_ref[...].astype(jnp.float32)

    if msub % tsub != 0:
        # Tail tile: rows past the array end hold garbage -> mask q, p to 0,
        # which contributes exactly 0 to every one of the six statistics.
        rem = msub - i * tsub
        row = jax.lax.broadcasted_iota(jnp.int32, q.shape, 1)
        keep = row < rem
        q = jnp.where(keep, q, 0.0)
        p = jnp.where(keep, p, 0.0)

    ce = -p * jnp.log(jnp.maximum(q, 1e-5))      # unweighted CE (weight applied in JAX)
    pq = p * q
    q_bin = jnp.where(q > 0.5, 1.0, 0.0)         # hard-thresholded prediction
    pqb = p * q_bin

    acc_ref[0] += _tree_fold_rows(ce, acc_rows)
    acc_ref[1] += _tree_fold_rows(pq, acc_rows)
    acc_ref[2] += _tree_fold_rows(q, acc_rows)
    acc_ref[3] += _tree_fold_rows(p, acc_rows)
    acc_ref[4] += _tree_fold_rows(pqb, acc_rows)
    acc_ref[5] += _tree_fold_rows(q_bin, acc_rows)

    @pl.when(i == pl.num_programs(1) - 1)
    def _():
        for s in range(_NSTATS):
            out_ref[:, s:s + 1] = acc_ref[s].sum(axis=2).sum(axis=1, keepdims=True)


def _channel_stats(q, p):
    """q, p: (N, C, *spatial). Returns (C, _NSTATS) float32 per-channel sums."""
    N, C = q.shape[0], q.shape[1]
    M = int(np.prod(q.shape[2:]))

    qf = q.reshape(N, C, M)
    pf = p.reshape(N, C, M)
    if M % _LANES != 0:
        # TODO(synk): fallback pays one HBM pad copy; spatial sizes that are
        # multiples of 128 take the zero-copy path (zero-padding is exact for
        # all six statistics since p=0, q=0 contributes 0 everywhere).
        pad = (-M) % _LANES
        qf = jnp.pad(qf, ((0, 0), (0, 0), (0, pad)))
        pf = jnp.pad(pf, ((0, 0), (0, 0), (0, pad)))
        M += pad

    msub = M // _LANES
    q4 = qf.reshape(N, C, msub, _LANES)      # metadata-only reshape, no copy
    p4 = pf.reshape(N, C, msub, _LANES)

    if msub <= _TSUB_TARGET:
        tsub = msub                           # single block along the sub axis
    else:
        tsub = (_TSUB_TARGET // 8) * 8        # multiple of 8 (sublane tiling)
    acc_rows = 8 if tsub % 8 == 0 else tsub

    grid = (N, pl.cdiv(msub, tsub))
    kernel = functools.partial(_stats_kernel, msub=msub, tsub=tsub,
                               acc_rows=acc_rows)

    out = pl.pallas_call(
        kernel,
        out_shape=jax.ShapeDtypeStruct((N, C, _NSTATS), jnp.float32),
        grid_spec=pltpu.PrefetchScalarGridSpec(
            num_scalar_prefetch=0,
            grid=grid,
            in_specs=[
                pl.BlockSpec((None, C, tsub, _LANES), lambda n, i: (n, 0, i, 0)),
                pl.BlockSpec((None, C, tsub, _LANES), lambda n, i: (n, 0, i, 0)),
            ],
            out_specs=pl.BlockSpec((None, C, _NSTATS), lambda n, i: (n, 0, 0)),
            scratch_shapes=[
                pltpu.VMEM((_NSTATS, C, acc_rows, _LANES), jnp.float32)],
        ),
        compiler_params=pltpu.CompilerParams(
            # batch axis feeds both TensorCores on megacore parts (v7x);
            # the tile axis is the resident-accumulator reduction axis.
            dimension_semantics=("parallel", "arbitrary")),
    )(q4, p4)

    return out.sum(axis=0)                    # fold per-batch partials -> (C, 6)


@jax.jit
def _loss_impl(out2d, out3d, labels, labels_2d):
    smooth = 1.0
    # per-channel wce weights from the reference module: [0.1, 1, 3, 1, 3]
    weight = jnp.array([0.1, 1.0, 3.0, 1.0, 3.0], jnp.float32)
    # TODO(synk): `dice_weight` / `weight_d` in the reference forward are dead
    # code (never used in the returned loss), so they are not reproduced.

    s3 = _channel_stats(out3d, labels)        # (C, 6)
    ce_c, pq_c, q_c, p_c, pqb_c, qb_c = (s3[:, k] for k in range(_NSTATS))

    n_elems = float(np.prod(out3d.shape))     # mean over ALL elements (incl. C)
    wce_mean = jnp.sum(ce_c * weight) / n_elems

    dice_mean = (2.0 * pq_c.sum() + smooth) / (q_c.sum() + p_c.sum() + smooth)
    diceloss = 1.0 - dice_mean

    s2 = _channel_stats(out2d, labels_2d)     # only pq / q / p columns are used
    dice_mean_2d = (2.0 * s2[:, 1].sum() + smooth) / (s2[:, 2].sum() + s2[:, 3].sum() + smooth)
    diceloss_2d = 1.0 - dice_mean_2d

    # per-class hard dice (channels 1..4)
    dice_c = (2.0 * pqb_c + smooth) / (qb_c + p_c + smooth)

    myloss = 0.5 * diceloss + 0.5 * diceloss_2d + wce_mean
    return myloss, dice_c, wce_mean, dice_mean, dice_mean_2d


def my_loss(out2d, out3d, labels, labels_2d):
    myloss, dice_c, wce_mean, dice_mean, dice_mean_2d = _loss_impl(
        out2d, out3d, labels, labels_2d)

    # Single host sync below: everything above ran as one jitted dispatch.
    dice_np = np.asarray(dice_c)
    print('WBCE:%04f' % float(wce_mean), 'Dice3D:%04f ' % float(dice_mean),
          'Dice2D:%04f ' % float(dice_mean_2d))
    print('3D: Dice1:%04f' % dice_np[1], 'Dice2:%04f' % dice_np[2],
          'Dice3:%04f' % dice_np[3], 'Dice4:%04f' % dice_np[4])

    dices = np.array([dice_np[1], dice_np[2], dice_np[3], dice_np[4]])
    return myloss, dices


if __name__ == "__main__":
    key = jax.random.PRNGKey(0)
    k1, k2, k3, k4 = jax.random.split(key, 4)

    N, C, D, H, W = 2, 5, 4, 8, 16        # 3-D head: (N, C, D, H, W)
    H2 = W2 = 16                          # 2-D head: (N, C, H, W)

    out3d = jax.nn.softmax(jax.random.normal(k1, (N, C, D, H, W), jnp.float32), axis=1)
    labels = (jax.random.uniform(k2, (N, C, D, H, W)) > 0.5).astype(jnp.float32)
    out2d = jax.nn.softmax(jax.random.normal(k3, (N, C, H2, W2), jnp.float32), axis=1)
    labels_2d = (jax.random.uniform(k4, (N, C, H2, W2)) > 0.5).astype(jnp.float32)

    myloss, dices = my_loss(out2d, out3d, labels, labels_2d)
    jax.block_until_ready(myloss)
    assert np.isfinite(float(myloss)) and np.all(np.isfinite(dices))
    print("KERNEL_OK")
</pallas_src>

<mosaic_0001>
module attributes {stable_mosaic.version = 11 : i64} {
  func.func @_stats_kernel(%arg0: i32, %arg1: i32, %arg2: memref<1x5x4x128xf32, #tpu.memory_space<vmem>>, %arg3: memref<1x5x4x128xf32, #tpu.memory_space<vmem>>, %arg4: memref<1x5x6xf32, #tpu.memory_space<vmem>>, %arg5: memref<6x5x4x128xf32, #tpu.memory_space<vmem>>) attributes {dimension_semantics = [#tpu.dimension_semantics<parallel>, #tpu.dimension_semantics<arbitrary>], iteration_bounds = array<i64: 2, 1>, scalar_prefetch = 0 : i64, scratch_operands = 1 : i64, tpu.core_type = #tpu.core_type<tc>, window_params = [{transform_indices = @transform_0, window_bounds = array<i64: 1, 5, 4, 128>}, {transform_indices = @transform_1, window_bounds = array<i64: 1, 5, 4, 128>}, {transform_indices = @transform_2, window_bounds = array<i64: 1, 5, 6>}]} {
    %c0_i32 = arith.constant 0 : i32
    %0 = arith.cmpi eq, %arg1, %c0_i32 : i32
    %1 = arith.extui %0 : i1 to i32
    %c0_i32_0 = arith.constant 0 : i32
    %2 = arith.cmpi ne, %1, %c0_i32_0 : i32
    scf.if %2 {
      %cst_57 = arith.constant 0.000000e+00 : f32
      %59 = vector.broadcast %cst_57 : f32 to vector<6x5x4x128xf32>
      %c0_58 = arith.constant 0 : index
      %c0_59 = arith.constant 0 : index
      %c0_60 = arith.constant 0 : index
      %c0_61 = arith.constant 0 : index
      %60 = vector.load %arg5[%c0_58, %c0_59, %c0_60, %c0_61] : memref<6x5x4x128xf32, #tpu.memory_space<vmem>>, vector<6x5x4x128xf32>
      tpu.vector_store %arg5[%c0_58, %c0_59, %c0_60, %c0_61], %59 {strides = array<i32>} : memref<6x5x4x128xf32, #tpu.memory_space<vmem>>, vector<6x5x4x128xf32>,
    } else {
    }
    %c0 = arith.constant 0 : index
    %c0_1 = arith.constant 0 : index
    %c0_2 = arith.constant 0 : index
    %c0_3 = arith.constant 0 : index
    %3 = vector.load %arg2[%c0, %c0_1, %c0_2, %c0_3] : memref<1x5x4x128xf32, #tpu.memory_space<vmem>>, vector<1x5x4x128xf32>
    %4 = vector.shape_cast %3 : vector<1x5x4x128xf32> to vector<5x4x128xf32>
    %c0_4 = arith.constant 0 : index
    %c0_5 = arith.constant 0 : index
    %c0_6 = arith.constant 0 : index
    %c0_7 = arith.constant 0 : index
    %5 = vector.load %arg3[%c0_4, %c0_5, %c0_6, %c0_7] : memref<1x5x4x128xf32, #tpu.memory_space<vmem>>, vector<1x5x4x128xf32>
    %6 = vector.shape_cast %5 : vector<1x5x4x128xf32> to vector<5x4x128xf32>
    %cst = arith.constant 0.000000e+00 : f32
    %7 = vector.broadcast %cst : f32 to vector<5x4x128xf32>
    %8 = arith.subf %7, %6 : vector<5x4x128xf32>
    %cst_8 = arith.constant 9.99999974E-6 : f32
    %9 = vector.broadcast %cst_8 : f32 to vector<5x4x128xf32>
    %10 = arith.maximumf %4, %9 : vector<5x4x128xf32>
    %11 = math.log %10 : vector<5x4x128xf32>
    %12 = arith.mulf %8, %11 : vector<5x4x128xf32>
    %13 = arith.mulf %6, %4 : vector<5x4x128xf32>
    %cst_9 = arith.constant 5.000000e-01 : f32
    %14 = vector.broadcast %cst_9 : f32 to vector<5x4x128xf32>
    %15 = arith.cmpf ogt, %4, %14 : vector<5x4x128xf32>
    %cst_10 = arith.constant 1.000000e+00 : f32
    %cst_11 = arith.constant 0.000000e+00 : f32
    %16 = vector.broadcast %cst_10 : f32 to vector<5x4x128xf32>
    %17 = vector.broadcast %cst_11 : f32 to vector<5x4x128xf32>
    %18 = arith.select %15, %16, %17 : vector<5x4x128xi1>, vector<5x4x128xf32>
    %19 = arith.mulf %6, %18 : vector<5x4x128xf32>
    %c0_12 = arith.constant 0 : index
    %c0_13 = arith.constant 0 : index
    %c0_14 = arith.constant 0 : index
    %c0_15 = arith.constant 0 : index
    %20 = vector.load %arg5[%c0_12, %c0_13, %c0_14, %c0_15] : memref<6x5x4x128xf32, #tpu.memory_space<vmem>>, vector<1x5x4x128xf32>
    %21 = vector.shape_cast %20 : vector<1x5x4x128xf32> to vector<5x4x128xf32>
    %22 = arith.addf %21, %12 : vector<5x4x128xf32>
    %c0_16 = arith.constant 0 : index
    %c0_17 = arith.constant 0 : index
    %c0_18 = arith.constant 0 : index
    %c0_19 = arith.constant 0 : index
    %23 = vector.load %arg5[%c0_16, %c0_17, %c0_18, %c0_19] : memref<6x5x4x128xf32, #tpu.memory_space<vmem>>, vector<1x5x4x128xf32>
    %24 = vector.shape_cast %23 : vector<1x5x4x128xf32> to vector<5x4x128xf32>
    %25 = vector.shape_cast %22 : vector<5x4x128xf32> to vector<1x5x4x128xf32>
    tpu.vector_store %arg5[%c0_16, %c0_17, %c0_18, %c0_19], %25 {strides = array<i32>} : memref<6x5x4x128xf32, #tpu.memory_space<vmem>>, vector<1x5x4x128xf32>,
    %c1 = arith.constant 1 : index
    %c0_20 = arith.constant 0 : index
    %c0_21 = arith.constant 0 : index
    %c0_22 = arith.constant 0 : index
    %26 = vector.load %arg5[%c1, %c0_20, %c0_21, %c0_22] : memref<6x5x4x128xf32, #tpu.memory_space<vmem>>, vector<1x5x4x128xf32>
    %27 = vector.shape_cast %26 : vector<1x5x4x128xf32> to vector<5x4x128xf32>
    %28 = arith.addf %27, %13 : vector<5x4x128xf32>
    %c1_23 = arith.constant 1 : index
    %c0_24 = arith.constant 0 : index
    %c0_25 = arith.constant 0 : index
    %c0_26 = arith.constant 0 : index
    %29 = vector.load %arg5[%c1_23, %c0_24, %c0_25, %c0_26] : memref<6x5x4x128xf32, #tpu.memory_space<vmem>>, vector<1x5x4x128xf32>
    %30 = vector.shape_cast %29 : vector<1x5x4x128xf32> to vector<5x4x128xf32>
    %31 = vector.shape_cast %28 : vector<5x4x128xf32> to vector<1x5x4x128xf32>
    tpu.vector_store %arg5[%c1_23, %c0_24, %c0_25, %c0_26], %31 {strides = array<i32>} : memref<6x5x4x128xf32, #tpu.memory_space<vmem>>, vector<1x5x4x128xf32>,
    %c2 = arith.constant 2 : index
    %c0_27 = arith.constant 0 : index
    %c0_28 = arith.constant 0 : index
    %c0_29 = arith.constant 0 : index
    %32 = vector.load %arg5[%c2, %c0_27, %c0_28, %c0_29] : memref<6x5x4x128xf32, #tpu.memory_space<vmem>>, vector<1x5x4x128xf32>
    %33 = vector.shape_cast %32 : vector<1x5x4x128xf32> to vector<5x4x128xf32>
    %34 = arith.addf %33, %4 : vector<5x4x128xf32>
    %c2_30 = arith.constant 2 : index
    %c0_31 = arith.constant 0 : index
    %c0_32 = arith.constant 0 : index
    %c0_33 = arith.constant 0 : index
    %35 = vector.load %arg5[%c2_30, %c0_31, %c0_32, %c0_33] : memref<6x5x4x128xf32, #tpu.memory_space<vmem>>, vector<1x5x4x128xf32>
    %36 = vector.shape_cast %35 : vector<1x5x4x128xf32> to vector<5x4x128xf32>
    %37 = vector.shape_cast %34 : vector<5x4x128xf32> to vector<1x5x4x128xf32>
    tpu.vector_store %arg5[%c2_30, %c0_31, %c0_32, %c0_33], %37 {strides = array<i32>} : memref<6x5x4x128xf32, #tpu.memory_space<vmem>>, vector<1x5x4x128xf32>,
    %c3 = arith.constant 3 : index
    %c0_34 = arith.constant 0 : index
    %c0_35 = arith.constant 0 : index
    %c0_36 = arith.constant 0 : index
    %38 = vector.load %arg5[%c3, %c0_34, %c0_35, %c0_36] : memref<6x5x4x128xf32, #tpu.memory_space<vmem>>, vector<1x5x4x128xf32>
    %39 = vector.shape_cast %38 : vector<1x5x4x128xf32> to vector<5x4x128xf32>
    %40 = arith.addf %39, %6 : vector<5x4x128xf32>
    %c3_37 = arith.constant 3 : index
    %c0_38 = arith.constant 0 : index
    %c0_39 = arith.constant 0 : index
    %c0_40 = arith.constant 0 : index
    %41 = vector.load %arg5[%c3_37, %c0_38, %c0_39, %c0_40] : memref<6x5x4x128xf32, #tpu.memory_space<vmem>>, vector<1x5x4x128xf32>
    %42 = vector.shape_cast %41 : vector<1x5x4x128xf32> to vector<5x4x128xf32>
    %43 = vector.shape_cast %40 : vector<5x4x128xf32> to vector<1x5x4x128xf32>
    tpu.vector_store %arg5[%c3_37, %c0_38, %c0_39, %c0_40], %43 {strides = array<i32>} : memref<6x5x4x128xf32, #tpu.memory_space<vmem>>, vector<1x5x4x128xf32>,
    %c4 = arith.constant 4 : index
    %c0_41 = arith.constant 0 : index
    %c0_42 = arith.constant 0 : index
    %c0_43 = arith.constant 0 : index
    %44 = vector.load %arg5[%c4, %c0_41, %c0_42, %c0_43] : memref<6x5x4x128xf32, #tpu.memory_space<vmem>>, vector<1x5x4x128xf32>
    %45 = vector.shape_cast %44 : vector<1x5x4x128xf32> to vector<5x4x128xf32>
    %46 = arith.addf %45, %19 : vector<5x4x128xf32>
    %c4_44 = arith.constant 4 : index
    %c0_45 = arith.constant 0 : index
    %c0_46 = arith.constant 0 : index
    %c0_47 = arith.constant 0 : index
    %47 = vector.load %arg5[%c4_44, %c0_45, %c0_46, %c0_47] : memref<6x5x4x128xf32, #tpu.memory_space<vmem>>, vector<1x5x4x128xf32>
    %48 = vector.shape_cast %47 : vector<1x5x4x128xf32> to vector<5x4x128xf32>
    %49 = vector.shape_cast %46 : vector<5x4x128xf32> to vector<1x5x4x128xf32>
    tpu.vector_store %arg5[%c4_44, %c0_45, %c0_46, %c0_47], %49 {strides = array<i32>} : memref<6x5x4x128xf32, #tpu.memory_space<vmem>>, vector<1x5x4x128xf32>,
    %c5 = arith.constant 5 : index
    %c0_48 = arith.constant 0 : index
    %c0_49 = arith.constant 0 : index
    %c0_50 = arith.constant 0 : index
    %50 = vector.load %arg5[%c5, %c0_48, %c0_49, %c0_50] : memref<6x5x4x128xf32, #tpu.memory_space<vmem>>, vector<1x5x4x128xf32>
    %51 = vector.shape_cast %50 : vector<1x5x4x128xf32> to vector<5x4x128xf32>
    %52 = arith.addf %51, %18 : vector<5x4x128xf32>
    %c5_51 = arith.constant 5 : index
    %c0_52 = arith.constant 0 : index
    %c0_53 = arith.constant 0 : index
    %c0_54 = arith.constant 0 : index
    %53 = vector.load %arg5[%c5_51, %c0_52, %c0_53, %c0_54] : memref<6x5x4x128xf32, #tpu.memory_space<vmem>>, vector<1x5x4x128xf32>
    %54 = vector.shape_cast %53 : vector<1x5x4x128xf32> to vector<5x4x128xf32>
    %55 = vector.shape_cast %52 : vector<5x4x128xf32> to vector<1x5x4x128xf32>
    tpu.vector_store %arg5[%c5_51, %c0_52, %c0_53, %c0_54], %55 {strides = array<i32>} : memref<6x5x4x128xf32, #tpu.memory_space<vmem>>, vector<1x5x4x128xf32>,
    %c0_i32_55 = arith.constant 0 : i32
    %56 = arith.cmpi eq, %arg1, %c0_i32_55 : i32
    %57 = arith.extui %56 : i1 to i32
    %c0_i32_56 = arith.constant 0 : i32
    %58 = arith.cmpi ne, %57, %c0_i32_56 : i32
    scf.if %58 {
      %c0_57 = arith.constant 0 : index
      %c0_58 = arith.constant 0 : index
      %c0_59 = arith.constant 0 : index
      %c0_60 = arith.constant 0 : index
      %59 = vector.load %arg5[%c0_57, %c0_58, %c0_59, %c0_60] : memref<6x5x4x128xf32, #tpu.memory_space<vmem>>, vector<1x5x4x128xf32>
      %60 = vector.shape_cast %59 : vector<1x5x4x128xf32> to vector<5x4x128xf32>
      %cst_61 = arith.constant dense<0.000000e+00> : vector<5x4xf32>
      %61 = vector.multi_reduction <add>, %60, %cst_61 [2] : vector<5x4x128xf32> to vector<5x4xf32>
      %cst_62 = arith.constant dense<0.000000e+00> : vector<5xf32>
      %62 = vector.multi_reduction <add>, %61, %cst_62 [1] : vector<5x4xf32> to vector<5xf32>
      %63 = vector.shape_cast %62 : vector<5xf32> to vector<5x1xf32>
      %c0_63 = arith.constant 0 : index
      %c0_64 = arith.constant 0 : index
      %c0_65 = arith.constant 0 : index
      %64 = vector.load %arg4[%c0_63, %c0_64, %c0_65] : memref<1x5x6xf32, #tpu.memory_space<vmem>>, vector<1x5x1xf32>
      %65 = vector.shape_cast %64 : vector<1x5x1xf32> to vector<5x1xf32>
      %66 = vector.shape_cast %63 : vector<5x1xf32> to vector<1x5x1xf32>
      tpu.vector_store %arg4[%c0_63, %c0_64, %c0_65], %66 {strides = array<i32>} : memref<1x5x6xf32, #tpu.memory_space<vmem>>, vector<1x5x1xf32>,
      %c1_66 = arith.constant 1 : index
      %c0_67 = arith.constant 0 : index
      %c0_68 = arith.constant 0 : index
      %c0_69 = arith.constant 0 : index
      %67 = vector.load %arg5[%c1_66, %c0_67, %c0_68, %c0_69] : memref<6x5x4x128xf32, #tpu.memory_space<vmem>>, vector<1x5x4x128xf32>
      %68 = vector.shape_cast %67 : vector<1x5x4x128xf32> to vector<5x4x128xf32>
      %cst_70 = arith.constant dense<0.000000e+00> : vector<5x4xf32>
      %69 = vector.multi_reduction <add>, %68, %cst_70 [2] : vector<5x4x128xf32> to vector<5x4xf32>
      %cst_71 = arith.constant dense<0.000000e+00> : vector<5xf32>
      %70 = vector.multi_reduction <add>, %69, %cst_71 [1] : vector<5x4xf32> to vector<5xf32>
      %71 = vector.shape_cast %70 : vector<5xf32> to vector<5x1xf32>
      %c0_72 = arith.constant 0 : index
      %c0_73 = arith.constant 0 : index
      %c1_74 = arith.constant 1 : index
      %72 = vector.load %arg4[%c0_72, %c0_73, %c1_74] : memref<1x5x6xf32, #tpu.memory_space<vmem>>, vector<1x5x1xf32>
      %73 = vector.shape_cast %72 : vector<1x5x1xf32> to vector<5x1xf32>
      %74 = vector.shape_cast %71 : vector<5x1xf32> to vector<1x5x1xf32>
      tpu.vector_store %arg4[%c0_72, %c0_73, %c1_74], %74 {strides = array<i32>} : memref<1x5x6xf32, #tpu.memory_space<vmem>>, vector<1x5x1xf32>,
      %c2_75 = arith.constant 2 : index
      %c0_76 = arith.constant 0 : index
      %c0_77 = arith.constant 0 : index
      %c0_78 = arith.constant 0 : index
      %75 = vector.load %arg5[%c2_75, %c0_76, %c0_77, %c0_78] : memref<6x5x4x128xf32, #tpu.memory_space<vmem>>, vector<1x5x4x128xf32>
      %76 = vector.shape_cast %75 : vector<1x5x4x128xf32> to vector<5x4x128xf32>
      %cst_79 = arith.constant dense<0.000000e+00> : vector<5x4xf32>
      %77 = vector.multi_reduction <add>, %76, %cst_79 [2] : vector<5x4x128xf32> to vector<5x4xf32>
      %cst_80 = arith.constant dense<0.000000e+00> : vector<5xf32>
      %78 = vector.multi_reduction <add>, %77, %cst_80 [1] : vector<5x4xf32> to vector<5xf32>
      %79 = vector.shape_cast %78 : vector<5xf32> to vector<5x1xf32>
      %c0_81 = arith.constant 0 : index
      %c0_82 = arith.constant 0 : index
      %c2_83 = arith.constant 2 : index
      %80 = vector.load %arg4[%c0_81, %c0_82, %c2_83] : memref<1x5x6xf32, #tpu.memory_space<vmem>>, vector<1x5x1xf32>
      %81 = vector.shape_cast %80 : vector<1x5x1xf32> to vector<5x1xf32>
      %82 = vector.shape_cast %79 : vector<5x1xf32> to vector<1x5x1xf32>
      tpu.vector_store %arg4[%c0_81, %c0_82, %c2_83], %82 {strides = array<i32>} : memref<1x5x6xf32, #tpu.memory_space<vmem>>, vector<1x5x1xf32>,
      %c3_84 = arith.constant 3 : index
      %c0_85 = arith.constant 0 : index
      %c0_86 = arith.constant 0 : index
      %c0_87 = arith.constant 0 : index
      %83 = vector.load %arg5[%c3_84, %c0_85, %c0_86, %c0_87] : memref<6x5x4x128xf32, #tpu.memory_space<vmem>>, vector<1x5x4x128xf32>
      %84 = vector.shape_cast %83 : vector<1x5x4x128xf32> to vector<5x4x128xf32>
      %cst_88 = arith.constant dense<0.000000e+00> : vector<5x4xf32>
      %85 = vector.multi_reduction <add>, %84, %cst_88 [2] : vector<5x4x128xf32> to vector<5x4xf32>
      %cst_89 = arith.constant dense<0.000000e+00> : vector<5xf32>
      %86 = vector.multi_reduction <add>, %85, %cst_89 [1] : vector<5x4xf32> to vector<5xf32>
      %87 = vector.shape_cast %86 : vector<5xf32> to vector<5x1xf32>
      %c0_90 = arith.constant 0 : index
      %c0_91 = arith.constant 0 : index
      %c3_92 = arith.constant 3 : index
      %88 = vector.load %arg4[%c0_90, %c0_91, %c3_92] : memref<1x5x6xf32, #tpu.memory_space<vmem>>, vector<1x5x1xf32>
      %89 = vector.shape_cast %88 : vector<1x5x1xf32> to vector<5x1xf32>
      %90 = vector.shape_cast %87 : vector<5x1xf32> to vector<1x5x1xf32>
      tpu.vector_store %arg4[%c0_90, %c0_91, %c3_92], %90 {strides = array<i32>} : memref<1x5x6xf32, #tpu.memory_space<vmem>>, vector<1x5x1xf32>,
      %c4_93 = arith.constant 4 : index
      %c0_94 = arith.constant 0 : index
      %c0_95 = arith.constant 0 : index
      %c0_96 = arith.constant 0 : index
      %91 = vector.load %arg5[%c4_93, %c0_94, %c0_95, %c0_96] : memref<6x5x4x128xf32, #tpu.memory_space<vmem>>, vector<1x5x4x128xf32>
      %92 = vector.shape_cast %91 : vector<1x5x4x128xf32> to vector<5x4x128xf32>
      %cst_97 = arith.constant dense<0.000000e+00> : vector<5x4xf32>
      %93 = vector.multi_reduction <add>, %92, %cst_97 [2] : vector<5x4x128xf32> to vector<5x4xf32>
      %cst_98 = arith.constant dense<0.000000e+00> : vector<5xf32>
      %94 = vector.multi_reduction <add>, %93, %cst_98 [1] : vector<5x4xf32> to vector<5xf32>
      %95 = vector.shape_cast %94 : vector<5xf32> to vector<5x1xf32>
      %c0_99 = arith.constant 0 : index
      %c0_100 = arith.constant 0 : index
      %c4_101 = arith.constant 4 : index
      %96 = vector.load %arg4[%c0_99, %c0_100, %c4_101] : memref<1x5x6xf32, #tpu.memory_space<vmem>>, vector<1x5x1xf32>
      %97 = vector.shape_cast %96 : vector<1x5x1xf32> to vector<5x1xf32>
      %98 = vector.shape_cast %95 : vector<5x1xf32> to vector<1x5x1xf32>
      tpu.vector_store %arg4[%c0_99, %c0_100, %c4_101], %98 {strides = array<i32>} : memref<1x5x6xf32, #tpu.memory_space<vmem>>, vector<1x5x1xf32>,
      %c5_102 = arith.constant 5 : index
      %c0_103 = arith.constant 0 : index
      %c0_104 = arith.constant 0 : index
      %c0_105 = arith.constant 0 : index
      %99 = vector.load %arg5[%c5_102, %c0_103, %c0_104, %c0_105] : memref<6x5x4x128xf32, #tpu.memory_space<vmem>>, vector<1x5x4x128xf32>
      %100 = vector.shape_cast %99 : vector<1x5x4x128xf32> to vector<5x4x128xf32>
      %cst_106 = arith.constant dense<0.000000e+00> : vector<5x4xf32>
      %101 = vector.multi_reduction <add>, %100, %cst_106 [2] : vector<5x4x128xf32> to vector<5x4xf32>
      %cst_107 = arith.constant dense<0.000000e+00> : vector<5xf32>
      %102 = vector.multi_reduction <add>, %101, %cst_107 [1] : vector<5x4xf32> to vector<5xf32>
      %103 = vector.shape_cast %102 : vector<5xf32> to vector<5x1xf32>
      %c0_108 = arith.constant 0 : index
      %c0_109 = arith.constant 0 : index
      %c5_110 = arith.constant 5 : index
      %104 = vector.load %arg4[%c0_108, %c0_109, %c5_110] : memref<1x5x6xf32, #tpu.memory_space<vmem>>, vector<1x5x1xf32>
      %105 = vector.shape_cast %104 : vector<1x5x1xf32> to vector<5x1xf32>
      %106 = vector.shape_cast %103 : vector<5x1xf32> to vector<1x5x1xf32>
      tpu.vector_store %arg4[%c0_108, %c0_109, %c5_110], %106 {strides = array<i32>} : memref<1x5x6xf32, #tpu.memory_space<vmem>>, vector<1x5x1xf32>,
    } else {
    }
    return
  }
  func.func @transform_0(%arg0: i32, %arg1: i32) -> (i32, i32, i32, i32) {
    %c0_i32 = arith.constant 0 : i32
    %c0_i32_0 = arith.constant 0 : i32
    %c0_i32_1 = arith.constant 0 : i32
    return %arg0, %c0_i32, %arg1, %c0_i32_0 : i32, i32, i32, i32
  }
  func.func @transform_1(%arg0: i32, %arg1: i32) -> (i32, i32, i32, i32) {
    %c0_i32 = arith.constant 0 : i32
    %c0_i32_0 = arith.constant 0 : i32
    %c0_i32_1 = arith.constant 0 : i32
    return %arg0, %c0_i32, %arg1, %c0_i32_0 : i32, i32, i32, i32
  }
  func.func @transform_2(%arg0: i32, %arg1: i32) -> (i32, i32, i32) {
    %c0_i32 = arith.constant 0 : i32
    %c0_i32_0 = arith.constant 0 : i32
    %c0_i32_1 = arith.constant 0 : i32
    return %arg0, %c0_i32, %c0_i32_0 : i32, i32, i32
  }
}

module attributes {stable_mosaic.version = 11 : i64} {
  func.func @_stats_kernel(%arg0: i32, %arg1: i32, %arg2: memref<1x5x2x128xf32, #tpu.memory_space<vmem>>, %arg3: memref<1x5x2x128xf32, #tpu.memory_space<vmem>>, %arg4: memref<1x5x6xf32, #tpu.memory_space<vmem>>, %arg5: memref<6x5x2x128xf32, #tpu.memory_space<vmem>>) attributes {dimension_semantics = [#tpu.dimension_semantics<parallel>, #tpu.dimension_semantics<arbitrary>], iteration_bounds = array<i64: 2, 1>, scalar_prefetch = 0 : i64, scratch_operands = 1 : i64, tpu.core_type = #tpu.core_type<tc>, window_params = [{transform_indices = @transform_0, window_bounds = array<i64: 1, 5, 2, 128>}, {transform_indices = @transform_1, window_bounds = array<i64: 1, 5, 2, 128>}, {transform_indices = @transform_2, window_bounds = array<i64: 1, 5, 6>}]} {
    %c0_i32 = arith.constant 0 : i32
    %0 = arith.cmpi eq, %arg1, %c0_i32 : i32
    %1 = arith.extui %0 : i1 to i32
    %c0_i32_0 = arith.constant 0 : i32
    %2 = arith.cmpi ne, %1, %c0_i32_0 : i32
    scf.if %2 {
      %cst_57 = arith.constant 0.000000e+00 : f32
      %59 = vector.broadcast %cst_57 : f32 to vector<6x5x2x128xf32>
      %c0_58 = arith.constant 0 : index
      %c0_59 = arith.constant 0 : index
      %c0_60 = arith.constant 0 : index
      %c0_61 = arith.constant 0 : index
      %60 = vector.load %arg5[%c0_58, %c0_59, %c0_60, %c0_61] : memref<6x5x2x128xf32, #tpu.memory_space<vmem>>, vector<6x5x2x128xf32>
      tpu.vector_store %arg5[%c0_58, %c0_59, %c0_60, %c0_61], %59 {strides = array<i32>} : memref<6x5x2x128xf32, #tpu.memory_space<vmem>>, vector<6x5x2x128xf32>,
    } else {
    }
    %c0 = arith.constant 0 : index
    %c0_1 = arith.constant 0 : index
    %c0_2 = arith.constant 0 : index
    %c0_3 = arith.constant 0 : index
    %3 = vector.load %arg2[%c0, %c0_1, %c0_2, %c0_3] : memref<1x5x2x128xf32, #tpu.memory_space<vmem>>, vector<1x5x2x128xf32>
    %4 = vector.shape_cast %3 : vector<1x5x2x128xf32> to vector<5x2x128xf32>
    %c0_4 = arith.constant 0 : index
    %c0_5 = arith.constant 0 : index
    %c0_6 = arith.constant 0 : index
    %c0_7 = arith.constant 0 : index
    %5 = vector.load %arg3[%c0_4, %c0_5, %c0_6, %c0_7] : memref<1x5x2x128xf32, #tpu.memory_space<vmem>>, vector<1x5x2x128xf32>
    %6 = vector.shape_cast %5 : vector<1x5x2x128xf32> to vector<5x2x128xf32>
    %cst = arith.constant 0.000000e+00 : f32
    %7 = vector.broadcast %cst : f32 to vector<5x2x128xf32>
    %8 = arith.subf %7, %6 : vector<5x2x128xf32>
    %cst_8 = arith.constant 9.99999974E-6 : f32
    %9 = vector.broadcast %cst_8 : f32 to vector<5x2x128xf32>
    %10 = arith.maximumf %4, %9 : vector<5x2x128xf32>
    %11 = math.log %10 : vector<5x2x128xf32>
    %12 = arith.mulf %8, %11 : vector<5x2x128xf32>
    %13 = arith.mulf %6, %4 : vector<5x2x128xf32>
    %cst_9 = arith.constant 5.000000e-01 : f32
    %14 = vector.broadcast %cst_9 : f32 to vector<5x2x128xf32>
    %15 = arith.cmpf ogt, %4, %14 : vector<5x2x128xf32>
    %cst_10 = arith.constant 1.000000e+00 : f32
    %cst_11 = arith.constant 0.000000e+00 : f32
    %16 = vector.broadcast %cst_10 : f32 to vector<5x2x128xf32>
    %17 = vector.broadcast %cst_11 : f32 to vector<5x2x128xf32>
    %18 = arith.select %15, %16, %17 : vector<5x2x128xi1>, vector<5x2x128xf32>
    %19 = arith.mulf %6, %18 : vector<5x2x128xf32>
    %c0_12 = arith.constant 0 : index
    %c0_13 = arith.constant 0 : index
    %c0_14 = arith.constant 0 : index
    %c0_15 = arith.constant 0 : index
    %20 = vector.load %arg5[%c0_12, %c0_13, %c0_14, %c0_15] : memref<6x5x2x128xf32, #tpu.memory_space<vmem>>, vector<1x5x2x128xf32>
    %21 = vector.shape_cast %20 : vector<1x5x2x128xf32> to vector<5x2x128xf32>
    %22 = arith.addf %21, %12 : vector<5x2x128xf32>
    %c0_16 = arith.constant 0 : index
    %c0_17 = arith.constant 0 : index
    %c0_18 = arith.constant 0 : index
    %c0_19 = arith.constant 0 : index
    %23 = vector.load %arg5[%c0_16, %c0_17, %c0_18, %c0_19] : memref<6x5x2x128xf32, #tpu.memory_space<vmem>>, vector<1x5x2x128xf32>
    %24 = vector.shape_cast %23 : vector<1x5x2x128xf32> to vector<5x2x128xf32>
    %25 = vector.shape_cast %22 : vector<5x2x128xf32> to vector<1x5x2x128xf32>
    tpu.vector_store %arg5[%c0_16, %c0_17, %c0_18, %c0_19], %25 {strides = array<i32>} : memref<6x5x2x128xf32, #tpu.memory_space<vmem>>, vector<1x5x2x128xf32>,
    %c1 = arith.constant 1 : index
    %c0_20 = arith.constant 0 : index
    %c0_21 = arith.constant 0 : index
    %c0_22 = arith.constant 0 : index
    %26 = vector.load %arg5[%c1, %c0_20, %c0_21, %c0_22] : memref<6x5x2x128xf32, #tpu.memory_space<vmem>>, vector<1x5x2x128xf32>
    %27 = vector.shape_cast %26 : vector<1x5x2x128xf32> to vector<5x2x128xf32>
    %28 = arith.addf %27, %13 : vector<5x2x128xf32>
    %c1_23 = arith.constant 1 : index
    %c0_24 = arith.constant 0 : index
    %c0_25 = arith.constant 0 : index
    %c0_26 = arith.constant 0 : index
    %29 = vector.load %arg5[%c1_23, %c0_24, %c0_25, %c0_26] : memref<6x5x2x128xf32, #tpu.memory_space<vmem>>, vector<1x5x2x128xf32>
    %30 = vector.shape_cast %29 : vector<1x5x2x128xf32> to vector<5x2x128xf32>
    %31 = vector.shape_cast %28 : vector<5x2x128xf32> to vector<1x5x2x128xf32>
    tpu.vector_store %arg5[%c1_23, %c0_24, %c0_25, %c0_26], %31 {strides = array<i32>} : memref<6x5x2x128xf32, #tpu.memory_space<vmem>>, vector<1x5x2x128xf32>,
    %c2 = arith.constant 2 : index
    %c0_27 = arith.constant 0 : index
    %c0_28 = arith.constant 0 : index
    %c0_29 = arith.constant 0 : index
    %32 = vector.load %arg5[%c2, %c0_27, %c0_28, %c0_29] : memref<6x5x2x128xf32, #tpu.memory_space<vmem>>, vector<1x5x2x128xf32>
    %33 = vector.shape_cast %32 : vector<1x5x2x128xf32> to vector<5x2x128xf32>
    %34 = arith.addf %33, %4 : vector<5x2x128xf32>
    %c2_30 = arith.constant 2 : index
    %c0_31 = arith.constant 0 : index
    %c0_32 = arith.constant 0 : index
    %c0_33 = arith.constant 0 : index
    %35 = vector.load %arg5[%c2_30, %c0_31, %c0_32, %c0_33] : memref<6x5x2x128xf32, #tpu.memory_space<vmem>>, vector<1x5x2x128xf32>
    %36 = vector.shape_cast %35 : vector<1x5x2x128xf32> to vector<5x2x128xf32>
    %37 = vector.shape_cast %34 : vector<5x2x128xf32> to vector<1x5x2x128xf32>
    tpu.vector_store %arg5[%c2_30, %c0_31, %c0_32, %c0_33], %37 {strides = array<i32>} : memref<6x5x2x128xf32, #tpu.memory_space<vmem>>, vector<1x5x2x128xf32>,
    %c3 = arith.constant 3 : index
    %c0_34 = arith.constant 0 : index
    %c0_35 = arith.constant 0 : index
    %c0_36 = arith.constant 0 : index
    %38 = vector.load %arg5[%c3, %c0_34, %c0_35, %c0_36] : memref<6x5x2x128xf32, #tpu.memory_space<vmem>>, vector<1x5x2x128xf32>
    %39 = vector.shape_cast %38 : vector<1x5x2x128xf32> to vector<5x2x128xf32>
    %40 = arith.addf %39, %6 : vector<5x2x128xf32>
    %c3_37 = arith.constant 3 : index
    %c0_38 = arith.constant 0 : index
    %c0_39 = arith.constant 0 : index
    %c0_40 = arith.constant 0 : index
    %41 = vector.load %arg5[%c3_37, %c0_38, %c0_39, %c0_40] : memref<6x5x2x128xf32, #tpu.memory_space<vmem>>, vector<1x5x2x128xf32>
    %42 = vector.shape_cast %41 : vector<1x5x2x128xf32> to vector<5x2x128xf32>
    %43 = vector.shape_cast %40 : vector<5x2x128xf32> to vector<1x5x2x128xf32>
    tpu.vector_store %arg5[%c3_37, %c0_38, %c0_39, %c0_40], %43 {strides = array<i32>} : memref<6x5x2x128xf32, #tpu.memory_space<vmem>>, vector<1x5x2x128xf32>,
    %c4 = arith.constant 4 : index
    %c0_41 = arith.constant 0 : index
    %c0_42 = arith.constant 0 : index
    %c0_43 = arith.constant 0 : index
    %44 = vector.load %arg5[%c4, %c0_41, %c0_42, %c0_43] : memref<6x5x2x128xf32, #tpu.memory_space<vmem>>, vector<1x5x2x128xf32>
    %45 = vector.shape_cast %44 : vector<1x5x2x128xf32> to vector<5x2x128xf32>
    %46 = arith.addf %45, %19 : vector<5x2x128xf32>
    %c4_44 = arith.constant 4 : index
    %c0_45 = arith.constant 0 : index
    %c0_46 = arith.constant 0 : index
    %c0_47 = arith.constant 0 : index
    %47 = vector.load %arg5[%c4_44, %c0_45, %c0_46, %c0_47] : memref<6x5x2x128xf32, #tpu.memory_space<vmem>>, vector<1x5x2x128xf32>
    %48 = vector.shape_cast %47 : vector<1x5x2x128xf32> to vector<5x2x128xf32>
    %49 = vector.shape_cast %46 : vector<5x2x128xf32> to vector<1x5x2x128xf32>
    tpu.vector_store %arg5[%c4_44, %c0_45, %c0_46, %c0_47], %49 {strides = array<i32>} : memref<6x5x2x128xf32, #tpu.memory_space<vmem>>, vector<1x5x2x128xf32>,
    %c5 = arith.constant 5 : index
    %c0_48 = arith.constant 0 : index
    %c0_49 = arith.constant 0 : index
    %c0_50 = arith.constant 0 : index
    %50 = vector.load %arg5[%c5, %c0_48, %c0_49, %c0_50] : memref<6x5x2x128xf32, #tpu.memory_space<vmem>>, vector<1x5x2x128xf32>
    %51 = vector.shape_cast %50 : vector<1x5x2x128xf32> to vector<5x2x128xf32>
    %52 = arith.addf %51, %18 : vector<5x2x128xf32>
    %c5_51 = arith.constant 5 : index
    %c0_52 = arith.constant 0 : index
    %c0_53 = arith.constant 0 : index
    %c0_54 = arith.constant 0 : index
    %53 = vector.load %arg5[%c5_51, %c0_52, %c0_53, %c0_54] : memref<6x5x2x128xf32, #tpu.memory_space<vmem>>, vector<1x5x2x128xf32>
    %54 = vector.shape_cast %53 : vector<1x5x2x128xf32> to vector<5x2x128xf32>
    %55 = vector.shape_cast %52 : vector<5x2x128xf32> to vector<1x5x2x128xf32>
    tpu.vector_store %arg5[%c5_51, %c0_52, %c0_53, %c0_54], %55 {strides = array<i32>} : memref<6x5x2x128xf32, #tpu.memory_space<vmem>>, vector<1x5x2x128xf32>,
    %c0_i32_55 = arith.constant 0 : i32
    %56 = arith.cmpi eq, %arg1, %c0_i32_55 : i32
    %57 = arith.extui %56 : i1 to i32
    %c0_i32_56 = arith.constant 0 : i32
    %58 = arith.cmpi ne, %57, %c0_i32_56 : i32
    scf.if %58 {
      %c0_57 = arith.constant 0 : index
      %c0_58 = arith.constant 0 : index
      %c0_59 = arith.constant 0 : index
      %c0_60 = arith.constant 0 : index
      %59 = vector.load %arg5[%c0_57, %c0_58, %c0_59, %c0_60] : memref<6x5x2x128xf32, #tpu.memory_space<vmem>>, vector<1x5x2x128xf32>
      %60 = vector.shape_cast %59 : vector<1x5x2x128xf32> to vector<5x2x128xf32>
      %cst_61 = arith.constant dense<0.000000e+00> : vector<5x2xf32>
      %61 = vector.multi_reduction <add>, %60, %cst_61 [2] : vector<5x2x128xf32> to vector<5x2xf32>
      %cst_62 = arith.constant dense<0.000000e+00> : vector<5xf32>
      %62 = vector.multi_reduction <add>, %61, %cst_62 [1] : vector<5x2xf32> to vector<5xf32>
      %63 = vector.shape_cast %62 : vector<5xf32> to vector<5x1xf32>
      %c0_63 = arith.constant 0 : index
      %c0_64 = arith.constant 0 : index
      %c0_65 = arith.constant 0 : index
      %64 = vector.load %arg4[%c0_63, %c0_64, %c0_65] : memref<1x5x6xf32, #tpu.memory_space<vmem>>, vector<1x5x1xf32>
      %65 = vector.shape_cast %64 : vector<1x5x1xf32> to vector<5x1xf32>
      %66 = vector.shape_cast %63 : vector<5x1xf32> to vector<1x5x1xf32>
      tpu.vector_store %arg4[%c0_63, %c0_64, %c0_65], %66 {strides = array<i32>} : memref<1x5x6xf32, #tpu.memory_space<vmem>>, vector<1x5x1xf32>,
      %c1_66 = arith.constant 1 : index
      %c0_67 = arith.constant 0 : index
      %c0_68 = arith.constant 0 : index
      %c0_69 = arith.constant 0 : index
      %67 = vector.load %arg5[%c1_66, %c0_67, %c0_68, %c0_69] : memref<6x5x2x128xf32, #tpu.memory_space<vmem>>, vector<1x5x2x128xf32>
      %68 = vector.shape_cast %67 : vector<1x5x2x128xf32> to vector<5x2x128xf32>
      %cst_70 = arith.constant dense<0.000000e+00> : vector<5x2xf32>
      %69 = vector.multi_reduction <add>, %68, %cst_70 [2] : vector<5x2x128xf32> to vector<5x2xf32>
      %cst_71 = arith.constant dense<0.000000e+00> : vector<5xf32>
      %70 = vector.multi_reduction <add>, %69, %cst_71 [1] : vector<5x2xf32> to vector<5xf32>
      %71 = vector.shape_cast %70 : vector<5xf32> to vector<5x1xf32>
      %c0_72 = arith.constant 0 : index
      %c0_73 = arith.constant 0 : index
      %c1_74 = arith.constant 1 : index
      %72 = vector.load %arg4[%c0_72, %c0_73, %c1_74] : memref<1x5x6xf32, #tpu.memory_space<vmem>>, vector<1x5x1xf32>
      %73 = vector.shape_cast %72 : vector<1x5x1xf32> to vector<5x1xf32>
      %74 = vector.shape_cast %71 : vector<5x1xf32> to vector<1x5x1xf32>
      tpu.vector_store %arg4[%c0_72, %c0_73, %c1_74], %74 {strides = array<i32>} : memref<1x5x6xf32, #tpu.memory_space<vmem>>, vector<1x5x1xf32>,
      %c2_75 = arith.constant 2 : index
      %c0_76 = arith.constant 0 : index
      %c0_77 = arith.constant 0 : index
      %c0_78 = arith.constant 0 : index
      %75 = vector.load %arg5[%c2_75, %c0_76, %c0_77, %c0_78] : memref<6x5x2x128xf32, #tpu.memory_space<vmem>>, vector<1x5x2x128xf32>
      %76 = vector.shape_cast %75 : vector<1x5x2x128xf32> to vector<5x2x128xf32>
      %cst_79 = arith.constant dense<0.000000e+00> : vector<5x2xf32>
      %77 = vector.multi_reduction <add>, %76, %cst_79 [2] : vector<5x2x128xf32> to vector<5x2xf32>
      %cst_80 = arith.constant dense<0.000000e+00> : vector<5xf32>
      %78 = vector.multi_reduction <add>, %77, %cst_80 [1] : vector<5x2xf32> to vector<5xf32>
      %79 = vector.shape_cast %78 : vector<5xf32> to vector<5x1xf32>
      %c0_81 = arith.constant 0 : index
      %c0_82 = arith.constant 0 : index
      %c2_83 = arith.constant 2 : index
      %80 = vector.load %arg4[%c0_81, %c0_82, %c2_83] : memref<1x5x6xf32, #tpu.memory_space<vmem>>, vector<1x5x1xf32>
      %81 = vector.shape_cast %80 : vector<1x5x1xf32> to vector<5x1xf32>
      %82 = vector.shape_cast %79 : vector<5x1xf32> to vector<1x5x1xf32>
      tpu.vector_store %arg4[%c0_81, %c0_82, %c2_83], %82 {strides = array<i32>} : memref<1x5x6xf32, #tpu.memory_space<vmem>>, vector<1x5x1xf32>,
      %c3_84 = arith.constant 3 : index
      %c0_85 = arith.constant 0 : index
      %c0_86 = arith.constant 0 : index
      %c0_87 = arith.constant 0 : index
      %83 = vector.load %arg5[%c3_84, %c0_85, %c0_86, %c0_87] : memref<6x5x2x128xf32, #tpu.memory_space<vmem>>, vector<1x5x2x128xf32>
      %84 = vector.shape_cast %83 : vector<1x5x2x128xf32> to vector<5x2x128xf32>
      %cst_88 = arith.constant dense<0.000000e+00> : vector<5x2xf32>
      %85 = vector.multi_reduction <add>, %84, %cst_88 [2] : vector<5x2x128xf32> to vector<5x2xf32>
      %cst_89 = arith.constant dense<0.000000e+00> : vector<5xf32>
      %86 = vector.multi_reduction <add>, %85, %cst_89 [1] : vector<5x2xf32> to vector<5xf32>
      %87 = vector.shape_cast %86 : vector<5xf32> to vector<5x1xf32>
      %c0_90 = arith.constant 0 : index
      %c0_91 = arith.constant 0 : index
      %c3_92 = arith.constant 3 : index
      %88 = vector.load %arg4[%c0_90, %c0_91, %c3_92] : memref<1x5x6xf32, #tpu.memory_space<vmem>>, vector<1x5x1xf32>
      %89 = vector.shape_cast %88 : vector<1x5x1xf32> to vector<5x1xf32>
      %90 = vector.shape_cast %87 : vector<5x1xf32> to vector<1x5x1xf32>
      tpu.vector_store %arg4[%c0_90, %c0_91, %c3_92], %90 {strides = array<i32>} : memref<1x5x6xf32, #tpu.memory_space<vmem>>, vector<1x5x1xf32>,
      %c4_93 = arith.constant 4 : index
      %c0_94 = arith.constant 0 : index
      %c0_95 = arith.constant 0 : index
      %c0_96 = arith.constant 0 : index
      %91 = vector.load %arg5[%c4_93, %c0_94, %c0_95, %c0_96] : memref<6x5x2x128xf32, #tpu.memory_space<vmem>>, vector<1x5x2x128xf32>
      %92 = vector.shape_cast %91 : vector<1x5x2x128xf32> to vector<5x2x128xf32>
      %cst_97 = arith.constant dense<0.000000e+00> : vector<5x2xf32>
      %93 = vector.multi_reduction <add>, %92, %cst_97 [2] : vector<5x2x128xf32> to vector<5x2xf32>
      %cst_98 = arith.constant dense<0.000000e+00> : vector<5xf32>
      %94 = vector.multi_reduction <add>, %93, %cst_98 [1] : vector<5x2xf32> to vector<5xf32>
      %95 = vector.shape_cast %94 : vector<5xf32> to vector<5x1xf32>
      %c0_99 = arith.constant 0 : index
      %c0_100 = arith.constant 0 : index
      %c4_101 = arith.constant 4 : index
      %96 = vector.load %arg4[%c0_99, %c0_100, %c4_101] : memref<1x5x6xf32, #tpu.memory_space<vmem>>, vector<1x5x1xf32>
      %97 = vector.shape_cast %96 : vector<1x5x1xf32> to vector<5x1xf32>
      %98 = vector.shape_cast %95 : vector<5x1xf32> to vector<1x5x1xf32>
      tpu.vector_store %arg4[%c0_99, %c0_100, %c4_101], %98 {strides = array<i32>} : memref<1x5x6xf32, #tpu.memory_space<vmem>>, vector<1x5x1xf32>,
      %c5_102 = arith.constant 5 : index
      %c0_103 = arith.constant 0 : index
      %c0_104 = arith.constant 0 : index
      %c0_105 = arith.constant 0 : index
      %99 = vector.load %arg5[%c5_102, %c0_103, %c0_104, %c0_105] : memref<6x5x2x128xf32, #tpu.memory_space<vmem>>, vector<1x5x2x128xf32>
      %100 = vector.shape_cast %99 : vector<1x5x2x128xf32> to vector<5x2x128xf32>
      %cst_106 = arith.constant dense<0.000000e+00> : vector<5x2xf32>
      %101 = vector.multi_reduction <add>, %100, %cst_106 [2] : vector<5x2x128xf32> to vector<5x2xf32>
      %cst_107 = arith.constant dense<0.000000e+00> : vector<5xf32>
      %102 = vector.multi_reduction <add>, %101, %cst_107 [1] : vector<5x2xf32> to vector<5xf32>
      %103 = vector.shape_cast %102 : vector<5xf32> to vector<5x1xf32>
      %c0_108 = arith.constant 0 : index
      %c0_109 = arith.constant 0 : index
      %c5_110 = arith.constant 5 : index
      %104 = vector.load %arg4[%c0_108, %c0_109, %c5_110] : memref<1x5x6xf32, #tpu.memory_space<vmem>>, vector<1x5x1xf32>
      %105 = vector.shape_cast %104 : vector<1x5x1xf32> to vector<5x1xf32>
      %106 = vector.shape_cast %103 : vector<5x1xf32> to vector<1x5x1xf32>
      tpu.vector_store %arg4[%c0_108, %c0_109, %c5_110], %106 {strides = array<i32>} : memref<1x5x6xf32, #tpu.memory_space<vmem>>, vector<1x5x1xf32>,
    } else {
    }
    return
  }
  func.func @transform_0(%arg0: i32, %arg1: i32) -> (i32, i32, i32, i32) {
    %c0_i32 = arith.constant 0 : i32
    %c0_i32_0 = arith.constant 0 : i32
    %c0_i32_1 = arith.constant 0 : i32
    return %arg0, %c0_i32, %arg1, %c0_i32_0 : i32, i32, i32, i32
  }
  func.func @transform_1(%arg0: i32, %arg1: i32) -> (i32, i32, i32, i32) {
    %c0_i32 = arith.constant 0 : i32
    %c0_i32_0 = arith.constant 0 : i32
    %c0_i32_1 = arith.constant 0 : i32
    return %arg0, %c0_i32, %arg1, %c0_i32_0 : i32, i32, i32, i32
  }
  func.func @transform_2(%arg0: i32, %arg1: i32) -> (i32, i32, i32) {
    %c0_i32 = arith.constant 0 : i32
    %c0_i32_0 = arith.constant 0 : i32
    %c0_i32_1 = arith.constant 0 : i32
    return %arg0, %c0_i32, %c0_i32_0 : i32, i32, i32
  }
}

</mosaic_0001>

<llo_original>
// kernel: _loss_impl.2
$region0: #{_loss_impl.2}
  #allocation0 [shape = 'u32[]', space=smem, size = 0x4, offset = 0x4, fixed_abs, tag = 'smem constant byte address 0x4 - core index']
  #allocation1 [shape = 'u32[144,128]{1,0:T(1,128)}', space=vmem, size = 0x12000, scoped, tag = 'internal scratch']
  #allocation2 [shape = 'f32[6,5,4,128]{3,2,1,0:T(4,128)}', space=vmem, size = 0xf000, scoped, tag = 'scratch operand']
  %s0 = inlined_call_operand.vmem [shape: f32[2,5,4,128], index: 0, kind: input, shape index: {}]
  %s1 = inlined_call_operand.vmem [shape: f32[2,5,4,128], index: 1, kind: input, shape index: {}]
  %s2 = inlined_call_operand.vmem [shape: f32[2,5,6], index: 2, kind: output, shape index: {}]
  %s3 = sld [smem:[#allocation0]]
  $region49: #{_loss_impl.2} parent=0
    _
  %s5 = ssub.s32 1, %s3
  %s6 = scalar_select 0, %s5, %s3
  loop: start=0, step=1, limit=4
  $region2: #{_loss_impl.2} parent=0 // loop_pre_header
    _
  $region3: #{_loss_impl.2} parent=0 // loop_header
    %s8 = sphi 0, %s12
    %p9 = scmp.ge.s32.totalorder %s8, 4
    %s15 = sphi 0, %s27
    %s16 = sphi 0, %s23
    %s17 = sphi 0, %s15
    %s18 = sphi 0, %s16
    %s19 = sphi 0, %s17
    %s20 = sphi 0, %s18
    %s32 = sphi 0, %s34
    %s35 = sphi 0, %s32
    %s36 = sphi 0, %s35
    %s52 = sphi 0, %s36
    %s60 = sphi 0, %s62
    %s63 = sphi 0, %s60
    %s64 = sphi 0, %s63
    %s80 = sphi 0, %s64
    %s86 = sphi 0, %s88
    %s89 = sphi 0, %s86
    %s90 = sphi 0, %s89
    %s106 = sphi 0, %s90
  $region4: #{_loss_impl.2} parent=0 // loop_header_branch
    %11 = sbr.rel (%p9) target = $region8
  $region5: #{_loss_impl.2} parent=0 // loop_body
    %s13 = ssub.s32 %s8, 1
    %s14 = ssub.s32 %s8, 2
    %s21 = sadd.s32 1, %s16
    %p22 = scmp.ge.s32.totalorder %s21, 1
    %s23 = scalar_select %p22, 0, %s21
    %s24 = sadd.s32 1, %s15
    %s25 = scalar_select %p22, %s24, %s15
    %p26 = scmp.ge.s32.totalorder %s25, 2
    %s27 = scalar_select %p26, 0, %s25
    %s28 = ssub.s32 %s15, %s27
    %s29 = ssub.s32 %s16, %s23
    %s30 = sor.u32 %s28, %s29
    %p31 = scmp.eq.s32.totalorder %s30, 0
    %s33 = sadd.s32 %s32, 1
    %s34 = scalar_select %p31, %s32, %s33
    %p37 = pneg %p31
    %p38 = scmp.eq.s32.totalorder %s8, 1
    %p39 = por %p37, %p38
    %p40 = scmp.ne.s32.totalorder %s32, %s35
    %p41 = scmp.eq.s32.totalorder %s8, 0
    %p42 = por %p40, %p41
    %p43 = scmp.ne.s32.totalorder %s32, %s35
    %p44 = scmp.eq.s32.totalorder %s13, 1
    %p45 = por %p43, %p44
    %p46 = scmp.ne.s32.totalorder %s35, %s36
    %p47 = scmp.eq.s32.totalorder %s13, 0
    %p48 = por %p46, %p47
    %p49 = scmp.ne.s32.totalorder %s35, %s36
    %p50 = scmp.eq.s32.totalorder %s14, 1
    %p51 = por %p49, %p50
    %p53 = scmp.ne.s32.totalorder %s36, %s52
    %p54 = scmp.eq.s32.totalorder %s14, 0
    %p55 = por %p53, %p54
    %s56 = ssub.s32 %s15, %s27
    %s57 = ssub.s32 %s16, %s23
    %s58 = sor.u32 %s56, %s57
    %p59 = scmp.eq.s32.totalorder %s58, 0
    %s61 = sadd.s32 %s60, 1
    %s62 = scalar_select %p59, %s60, %s61
    %p65 = pneg %p59
    %p66 = scmp.eq.s32.totalorder %s8, 1
    %p67 = por %p65, %p66
    %p68 = scmp.ne.s32.totalorder %s60, %s63
    %p69 = scmp.eq.s32.totalorder %s8, 0
    %p70 = por %p68, %p69
    %p71 = scmp.ne.s32.totalorder %s60, %s63
    %p72 = scmp.eq.s32.totalorder %s13, 1
    %p73 = por %p71, %p72
    %p74 = scmp.ne.s32.totalorder %s63, %s64
    %p75 = scmp.eq.s32.totalorder %s13, 0
    %p76 = por %p74, %p75
    %p77 = scmp.ne.s32.totalorder %s63, %s64
    %p78 = scmp.eq.s32.totalorder %s14, 1
    %p79 = por %p77, %p78
    %p81 = scmp.ne.s32.totalorder %s64, %s80
    %p82 = scmp.eq.s32.totalorder %s14, 0
    %p83 = por %p81, %p82
    %s84 = ssub.s32 %s15, %s27
    %p85 = scmp.eq.s32.totalorder %s84, 0
    %s87 = sadd.s32 %s86, 1
    %s88 = scalar_select %p85, %s86, %s87
    %p91 = pneg %p85
    %p92 = scmp.eq.s32.totalorder %s8, 1
    %p93 = por %p91, %p92
    %p94 = scmp.ne.s32.totalorder %s86, %s89
    %p95 = scmp.eq.s32.totalorder %s8, 0
    %p96 = por %p94, %p95
    %p97 = scmp.ne.s32.totalorder %s86, %s89
    %p98 = scmp.eq.s32.totalorder %s13, 1
    %p99 = por %p97, %p98
    %p100 = scmp.ne.s32.totalorder %s89, %s90
    %p101 = scmp.eq.s32.totalorder %s13, 0
    %p102 = por %p100, %p101
    %p103 = scmp.ne.s32.totalorder %s89, %s90
    %p104 = scmp.eq.s32.totalorder %s14, 1
    %p105 = por %p103, %p104
    %p107 = scmp.ne.s32.totalorder %s90, %s106
    %p108 = scmp.eq.s32.totalorder %s14, 0
    %p109 = por %p107, %p108
    %p110 = scmp.le.s32.totalorder 1, %s8
    %p111 = scmp.lt.s32.totalorder %s8, 3
    %p112 = pnand %p110, %p111
    %p113 = pneg %p112
    // Predicated region
    $region9: #{_loss_impl.2} parent=5 // pred_check
      _
    $region10: #{_loss_impl.2} parent=5 // pred_check_branch
      %115 = sbr.rel (%p112) target = $region12
    $region11: #{_loss_impl.2} parent=5 // pred_region
      %s116 = ssub.s32 %s8, 1
    $region12: #{_loss_impl.2} parent=5 // pred_fallthru
      _
    %p117 = scmp.lt.s32.totalorder %s8, 2
    // Predicated region
    $region13: #{_loss_impl.2} parent=5 // pred_check
      %p118 = pneg %p117
    $region14: #{_loss_impl.2} parent=5 // pred_check_branch
      %120 = sbr.rel (%p118) target = $region16
    $region15: #{_loss_impl.2} parent=5 // pred_region
      // Predicated region
      $region17: #{_loss_impl.2} parent=15 // pred_check
        %p121 = pneg %p42
      $region18: #{_loss_impl.2} parent=15 // pred_check_branch
        %123 = sbr.rel (%p121) target = $region20
      $region19: #{_loss_impl.2} parent=15 // pred_region
        %p124 = scmp.lt.s32.totalorder %s15, 1
        %s125 = scalar_select %p124, %s15, 1
        %p126 = scmp.lt.s32.totalorder %s16, 0
        %s127 = scalar_select %p126, %s16, 0
        %s128 = smul.addr %s125, 5
        %s129 = sadd.s32 %s127, %s128
        %s130 = smul.addr %s129, 4
        %s131 = scalar_lea.vmem %s0, %s130
      $region20: #{_loss_impl.2} parent=15 // pred_fallthru
        _
      // Predicated region
      $region21: #{_loss_impl.2} parent=15 // pred_check
        %p132 = pneg %p70
      $region22: #{_loss_impl.2} parent=15 // pred_check_branch
        %134 = sbr.rel (%p132) target = $region24
      $region23: #{_loss_impl.2} parent=15 // pred_region
        %p135 = scmp.lt.s32.totalorder %s15, 1
        %s136 = scalar_select %p135, %s15, 1
        %p137 = scmp.lt.s32.totalorder %s16, 0
        %s138 = scalar_select %p137, %s16, 0
        %s139 = smul.addr %s136, 5
        %s140 = sadd.s32 %s138, %s139
        %s141 = smul.addr %s140, 4
        %s142 = scalar_lea.vmem %s1, %s141
      $region24: #{_loss_impl.2} parent=15 // pred_fallthru
        _
    $region16: #{_loss_impl.2} parent=5 // pred_fallthru
      _
    %p143 = scmp.le.s32.totalorder 1, %s8
    %p144 = scmp.lt.s32.totalorder %s8, 3
    %p145 = pnand %p143, %p144
    %p146 = pneg %p145
    // Predicated region
    $region25: #{_loss_impl.2} parent=5 // pred_check
      _
    $region26: #{_loss_impl.2} parent=5 // pred_check_branch
      %148 = sbr.rel (%p145) target = $region28
    $region27: #{_loss_impl.2} parent=5 // pred_region
      %s149 = ssub.s32 %s8, 1
      %p150 = scmp.lt.s32.totalorder %s17, 1
      %s151 = scalar_select %p150, %s17, 1
      %p152 = scmp.lt.s32.totalorder %s18, 0
      %s153 = scalar_select %p152, %s18, 0
      %s154 = smul.addr %s151, 5
      %s155 = sadd.s32 %s153, %s154
      %s156 = smul.addr %s155, 4
      %s157 = scalar_lea.vmem %s0, %s156
      %p158 = pneg %p48
      %p159 = pneg %p45
      %p160 = scmp.lt.s32.totalorder %s17, 1
      %s161 = scalar_select %p160, %s17, 1
      %p162 = scmp.lt.s32.totalorder %s18, 0
      %s163 = scalar_select %p162, %s18, 0
      %s164 = smul.addr %s161, 5
      %s165 = sadd.s32 %s163, %s164
      %s166 = smul.addr %s165, 4
      %s167 = scalar_lea.vmem %s1, %s166
      %p168 = pneg %p76
      %p169 = pneg %p73
      %p170 = pneg %p102
      %p171 = pneg %p99
      %p172 = scmp.lt.s32.totalorder %s17, 1
      %s173 = scalar_select %p172, %s17, 1
      %s174 = smul.addr %s173, 8
      %s175 = scalar_lea.vmem %s2, %s174
      %p176 = scmp.lt.s32.totalorder %s17, 1
      %s177 = scalar_select %p176, %s17, 1
      %p178 = scmp.lt.s32.totalorder %s18, 0
      %s179 = scalar_select %p178, %s18, 0
      %s180 = smul.addr %s177, 5
      %s181 = sadd.s32 %s179, %s180
      %s182 = smul.addr %s181, 4
      %s183 = scalar_lea.vmem %s0, %s182
      %p184 = scmp.lt.s32.totalorder %s17, 1
      %s185 = scalar_select %p184, %s17, 1
      %p186 = scmp.lt.s32.totalorder %s18, 0
      %s187 = scalar_select %p186, %s18, 0
      %s188 = smul.addr %s185, 5
      %s189 = sadd.s32 %s187, %s188
      %s190 = smul.addr %s189, 4
      %s191 = scalar_lea.vmem %s1, %s190
      %p192 = scmp.lt.s32.totalorder %s17, 1
      %s193 = scalar_select %p192, %s17, 1
      %s194 = smul.addr %s193, 8
      %s195 = scalar_lea.vmem %s2, %s194
      %p196 = scmp.eq.s32.totalorder %s18, 0
      // Predicated region
      $region29: #{_loss_impl.2} parent=27 // pred_check
        %p197 = pneg %p196
      $region30: #{_loss_impl.2} parent=27 // pred_check_branch
        %199 = sbr.rel (%p197) target = $region32
      $region31: #{_loss_impl.2} parent=27 // pred_region
        %200 = vst [vmem:[#allocation2] sm:$0xf] 0.0
        %201 = vst [vmem:[#allocation2 + $0x4] sm:$0xf] 0.0
        %202 = vst [vmem:[#allocation2 + $0x8] sm:$0xf] 0.0
        %203 = vst [vmem:[#allocation2 + $0xc] sm:$0xf] 0.0
        %204 = vst [vmem:[#allocation2 + $0x10] sm:$0xf] 0.0
        %205 = vst [vmem:[#allocation2 + $0x14] sm:$0xf] 0.0
        %206 = vst [vmem:[#allocation2 + $0x18] sm:$0xf] 0.0
        %207 = vst [vmem:[#allocation2 + $0x1c] sm:$0xf] 0.0
        %208 = vst [vmem:[#allocation2 + $0x20] sm:$0xf] 0.0
        %209 = vst [vmem:[#allocation2 + $0x24] sm:$0xf] 0.0
        %210 = vst [vmem:[#allocation2 + $0x28] sm:$0xf] 0.0
        %211 = vst [vmem:[#allocation2 + $0x2c] sm:$0xf] 0.0
        %212 = vst [vmem:[#allocation2 + $0x30] sm:$0xf] 0.0
        %213 = vst [vmem:[#allocation2 + $0x34] sm:$0xf] 0.0
        %214 = vst [vmem:[#allocation2 + $0x38] sm:$0xf] 0.0
        %215 = vst [vmem:[#allocation2 + $0x3c] sm:$0xf] 0.0
        %216 = vst [vmem:[#allocation2 + $0x40] sm:$0xf] 0.0
        %217 = vst [vmem:[#allocation2 + $0x44] sm:$0xf] 0.0
        %218 = vst [vmem:[#allocation2 + $0x48] sm:$0xf] 0.0
        %219 = vst [vmem:[#allocation2 + $0x4c] sm:$0xf] 0.0
        %220 = vst [vmem:[#allocation2 + $0x50] sm:$0xf] 0.0
        %221 = vst [vmem:[#allocation2 + $0x54] sm:$0xf] 0.0
        %222 = vst [vmem:[#allocation2 + $0x58] sm:$0xf] 0.0
        %223 = vst [vmem:[#allocation2 + $0x5c] sm:$0xf] 0.0
        %224 = vst [vmem:[#allocation2 + $0x60] sm:$0xf] 0.0
        %225 = vst [vmem:[#allocation2 + $0x64] sm:$0xf] 0.0
        %226 = vst [vmem:[#allocation2 + $0x68] sm:$0xf] 0.0
        %227 = vst [vmem:[#allocation2 + $0x6c] sm:$0xf] 0.0
        %228 = vst [vmem:[#allocation2 + $0x70] sm:$0xf] 0.0
        %229 = vst [vmem:[#allocation2 + $0x74] sm:$0xf] 0.0
      $region32: #{_loss_impl.2} parent=27 // pred_fallthru
        _
      %v230 = vld [vmem:[%s183] sm:$0xf]
      %v231 = vld [vmem:[%s183 + $0x4] sm:$0xf]
      %v232 = vld [vmem:[%s183 + $0x8] sm:$0xf]
      %v233 = vld [vmem:[%s183 + $0xc] sm:$0xf]
      %v234 = vld [vmem:[%s183 + $0x10] sm:$0xf]
      %v235 = vld [vmem:[%s191] sm:$0xf]
      %v236 = vld [vmem:[%s191 + $0x4] sm:$0xf]
      %v237 = vld [vmem:[%s191 + $0x8] sm:$0xf]
      %v238 = vld [vmem:[%s191 + $0xc] sm:$0xf]
      %v239 = vld [vmem:[%s191 + $0x10] sm:$0xf]
      %v240 = vsub.f32 0.0, %v235
      %v241 = vsub.f32 0.0, %v236
      %v242 = vsub.f32 0.0, %v237
      %v243 = vsub.f32 0.0, %v238
      %v244 = vsub.f32 0.0, %v239
      %v245 = vmax.f32 %v230, 1e-05
      %v246 = vmax.f32 %v231, 1e-05
      %v247 = vmax.f32 %v232, 1e-05
      %v248 = vmax.f32 %v233, 1e-05
      %v249 = vmax.f32 %v234, 1e-05
      %v250 = vlog2.pop %v245
      %v251 = vmul.f32 %v250, 0.6931472
      %v252 = vlog2.pop %v246
      %v253 = vmul.f32 %v252, 0.6931472
      %v254 = vlog2.pop %v247
      %v255 = vmul.f32 %v254, 0.6931472
      %v256 = vlog2.pop %v248
      %v257 = vmul.f32 %v256, 0.6931472
      %v258 = vlog2.pop %v249
      %v259 = vmul.f32 %v258, 0.6931472
      %v260 = vmul.f32 %v240, %v251
      %v261 = vmul.f32 %v241, %v253
      %v262 = vmul.f32 %v242, %v255
      %v263 = vmul.f32 %v243, %v257
      %v264 = vmul.f32 %v244, %v259
      %v265 = vmul.f32 %v235, %v230
      %v266 = vmul.f32 %v236, %v231
      %v267 = vmul.f32 %v237, %v232
      %v268 = vmul.f32 %v238, %v233
      %v269 = vmul.f32 %v239, %v234
      %vm270 = vcmp.gt.f32.partialorder %v230, 0.5
      %vm271 = vcmp.gt.f32.partialorder %v231, 0.5
      %vm272 = vcmp.gt.f32.partialorder %v232, 0.5
      %vm273 = vcmp.gt.f32.partialorder %v233, 0.5
      %vm274 = vcmp.gt.f32.partialorder %v234, 0.5
      %v275 = vsel %vm270, 1.0, 0.0
      %v276 = vsel %vm271, 1.0, 0.0
      %v277 = vsel %vm272, 1.0, 0.0
      %v278 = vsel %vm273, 1.0, 0.0
      %v279 = vsel %vm274, 1.0, 0.0
      %v280 = vmul.f32 %v235, %v275
      %v281 = vmul.f32 %v236, %v276
      %v282 = vmul.f32 %v237, %v277
      %v283 = vmul.f32 %v238, %v278
      %v284 = vmul.f32 %v239, %v279
      %v285 = vld [vmem:[#allocation2] sm:$0xf]
      %v286 = vld [vmem:[#allocation2 + $0x4] sm:$0xf]
      %v287 = vld [vmem:[#allocation2 + $0x8] sm:$0xf]
      %v288 = vld [vmem:[#allocation2 + $0xc] sm:$0xf]
      %v289 = vld [vmem:[#allocation2 + $0x10] sm:$0xf]
      %v290 = vadd.f32 %v285, %v260
      %v291 = vadd.f32 %v286, %v261
      %v292 = vadd.f32 %v287, %v262
      %v293 = vadd.f32 %v288, %v263
      %v294 = vadd.f32 %v289, %v264
      %295 = vst [vmem:[#allocation2] sm:$0xf] %v290
      %296 = vst [vmem:[#allocation2 + $0x4] sm:$0xf] %v291
      %297 = vst [vmem:[#allocation2 + $0x8] sm:$0xf] %v292
      %298 = vst [vmem:[#allocation2 + $0xc] sm:$0xf] %v293
      %299 = vst [vmem:[#allocation2 + $0x10] sm:$0xf] %v294
      %s300 = scalar_lea.vmem [#allocation2], 20
      %v301 = vld [vmem:[%s300] sm:$0xf]
      %v302 = vld [vmem:[%s300 + $0x4] sm:$0xf]
      %v303 = vld [vmem:[%s300 + $0x8] sm:$0xf]
      %v304 = vld [vmem:[%s300 + $0xc] sm:$0xf]
      %v305 = vld [vmem:[%s300 + $0x10] sm:$0xf]
      %v306 = vadd.f32 %v301, %v265
      %v307 = vadd.f32 %v302, %v266
      %v308 = vadd.f32 %v303, %v267
      %v309 = vadd.f32 %v304, %v268
      %v310 = vadd.f32 %v305, %v269
      %311 = vst [vmem:[%s300] sm:$0xf] %v306
      %312 = vst [vmem:[%s300 + $0x4] sm:$0xf] %v307
      %313 = vst [vmem:[%s300 + $0x8] sm:$0xf] %v308
      %314 = vst [vmem:[%s300 + $0xc] sm:$0xf] %v309
      %315 = vst [vmem:[%s300 + $0x10] sm:$0xf] %v310
      %s316 = scalar_lea.vmem [#allocation2], 40
      %v317 = vld [vmem:[%s316] sm:$0xf]
      %v318 = vld [vmem:[%s316 + $0x4] sm:$0xf]
      %v319 = vld [vmem:[%s316 + $0x8] sm:$0xf]
      %v320 = vld [vmem:[%s316 + $0xc] sm:$0xf]
      %v321 = vld [vmem:[%s316 + $0x10] sm:$0xf]
      %v322 = vadd.f32 %v317, %v230
      %v323 = vadd.f32 %v318, %v231
      %v324 = vadd.f32 %v319, %v232
      %v325 = vadd.f32 %v320, %v233
      %v326 = vadd.f32 %v321, %v234
      %327 = vst [vmem:[%s316] sm:$0xf] %v322
      %328 = vst [vmem:[%s316 + $0x4] sm:$0xf] %v323
      %329 = vst [vmem:[%s316 + $0x8] sm:$0xf] %v324
      %330 = vst [vmem:[%s316 + $0xc] sm:$0xf] %v325
      %331 = vst [vmem:[%s316 + $0x10] sm:$0xf] %v326
      %s332 = scalar_lea.vmem [#allocation2], 60
      %v333 = vld [vmem:[%s332] sm:$0xf]
      %v334 = vld [vmem:[%s332 + $0x4] sm:$0xf]
      %v335 = vld [vmem:[%s332 + $0x8] sm:$0xf]
      %v336 = vld [vmem:[%s332 + $0xc] sm:$0xf]
      %v337 = vld [vmem:[%s332 + $0x10] sm:$0xf]
      %v338 = vadd.f32 %v333, %v235
      %v339 = vadd.f32 %v334, %v236
      %v340 = vadd.f32 %v335, %v237
      %v341 = vadd.f32 %v336, %v238
      %v342 = vadd.f32 %v337, %v239
      %343 = vst [vmem:[%s332] sm:$0xf] %v338
      %344 = vst [vmem:[%s332 + $0x4] sm:$0xf] %v339
      %345 = vst [vmem:[%s332 + $0x8] sm:$0xf] %v340
      %346 = vst [vmem:[%s332 + $0xc] sm:$0xf] %v341
      %347 = vst [vmem:[%s332 + $0x10] sm:$0xf] %v342
      %s348 = scalar_lea.vmem [#allocation2], 80
      %v349 = vld [vmem:[%s348] sm:$0xf]
      %v350 = vld [vmem:[%s348 + $0x4] sm:$0xf]
      %v351 = vld [vmem:[%s348 + $0x8] sm:$0xf]
      %v352 = vld [vmem:[%s348 + $0xc] sm:$0xf]
      %v353 = vld [vmem:[%s348 + $0x10] sm:$0xf]
      %v354 = vadd.f32 %v349, %v280
      %v355 = vadd.f32 %v350, %v281
      %v356 = vadd.f32 %v351, %v282
      %v357 = vadd.f32 %v352, %v283
      %v358 = vadd.f32 %v353, %v284
      %359 = vst [vmem:[%s348] sm:$0xf] %v354
      %360 = vst [vmem:[%s348 + $0x4] sm:$0xf] %v355
      %361 = vst [vmem:[%s348 + $0x8] sm:$0xf] %v356
      %362 = vst [vmem:[%s348 + $0xc] sm:$0xf] %v357
      %363 = vst [vmem:[%s348 + $0x10] sm:$0xf] %v358
      %s364 = scalar_lea.vmem [#allocation2], 100
      %v365 = vld [vmem:[%s364] sm:$0xf]
      %v366 = vld [vmem:[%s364 + $0x4] sm:$0xf]
      %v367 = vld [vmem:[%s364 + $0x8] sm:$0xf]
      %v368 = vld [vmem:[%s364 + $0xc] sm:$0xf]
      %v369 = vld [vmem:[%s364 + $0x10] sm:$0xf]
      %v370 = vadd.f32 %v365, %v275
      %v371 = vadd.f32 %v366, %v276
      %v372 = vadd.f32 %v367, %v277
      %v373 = vadd.f32 %v368, %v278
      %v374 = vadd.f32 %v369, %v279
      %375 = vst [vmem:[%s364] sm:$0xf] %v370
      %376 = vst [vmem:[%s364 + $0x4] sm:$0xf] %v371
      %377 = vst [vmem:[%s364 + $0x8] sm:$0xf] %v372
      %378 = vst [vmem:[%s364 + $0xc] sm:$0xf] %v373
      %379 = vst [vmem:[%s364 + $0x10] sm:$0xf] %v374
      // Predicated region
      $region33: #{_loss_impl.2} parent=27 // pred_check
        %p380 = pneg %p196
      $region34: #{_loss_impl.2} parent=27 // pred_check_branch
        %382 = sbr.rel (%p380) target = $region36
      $region35: #{_loss_impl.2} parent=27 // pred_region
        %v383 = vld [vmem:[#allocation2] sm:$0xf]
        %v384 = vld [vmem:[#allocation2 + $0x4] sm:$0xf]
        %v385 = vld [vmem:[#allocation2 + $0x8] sm:$0xf]
        %v386 = vld [vmem:[#allocation2 + $0xc] sm:$0xf]
        %v387 = vld [vmem:[#allocation2 + $0x10] sm:$0xf]
        %vm388 = vcmask 1043456
        %v389 = vsel %vm388, %v383, 0.0
        %390 = vadd.xlane.f32.xlu0 %v389
        %v391 = vpop.xlane.xlu0 %390
        %v392 = vsel %vm388, %v384, 0.0
        %393 = vadd.xlane.f32.xlu0 %v392
        %v394 = vpop.xlane.xlu0 %393
        %v395 = vsel %vm388, %v385, 0.0
        %396 = vadd.xlane.f32.xlu0 %v395
        %v397 = vpop.xlane.xlu0 %396
        %v398 = vsel %vm388, %v386, 0.0
        %399 = vadd.xlane.f32.xlu0 %v398
        %v400 = vpop.xlane.xlu0 %399
        %v401 = vsel %vm388, %v387, 0.0
        %402 = vadd.xlane.f32.xlu0 %v401
        %v403 = vpop.xlane.xlu0 %402
        %v409 = vlaneseq
        %v410 = vand.u32 %v409, 127
        %v411 = vlaneseq
        %v412 = vshrl.u32 %v411, 7
        %v413 = vsub.s32 %v410, %v412
        %v414 = vrot.slane %v391, %v413
        %v415 = vlaneseq
        %v416 = vshrl.u32 %v415, 7
        %v417 = vsub.s32 %v410, %v416
        %v418 = vrot.slane %v394, %v417
        %v419 = vlaneseq
        %v420 = vshrl.u32 %v419, 7
        %v421 = vsub.s32 %v410, %v420
        %v422 = vrot.slane %v397, %v421
        %v423 = vlaneseq
        %v424 = vshrl.u32 %v423, 7
        %v425 = vsub.s32 %v410, %v424
        %v426 = vrot.slane %v400, %v425
        %v427 = vlaneseq
        %v428 = vshrl.u32 %v427, 7
        %v429 = vsub.s32 %v410, %v428
        %v430 = vrot.slane %v403, %v429
        %vm431 = vcmask 1041409
        %v432 = vsel %vm431, %v418, %v414
        %vm433 = vcmask 1042434
        %v434 = vsel %vm433, %v422, %v432
        %vm435 = vcmask 1043459
        %v436 = vsel %vm435, %v426, %v434
        %vm437 = vcmask 1044484
        %v438 = vsel %vm437, %v430, %v436
        %vm440 = vcmask 28672
        %v441 = vsel %vm440, %v438, 0.0
        %442 = vadd.xlane.f32.xlu0 %v441
        %v443 = vpop.xlane.xlu0 %442
        %vm444 = vcmask 4096
        %445 = vst.msk [vmem:[%s195] sm:$0x1f] %vm444, %v443
        %v446 = vld [vmem:[%s300] sm:$0xf]
        %v447 = vld [vmem:[%s300 + $0x4] sm:$0xf]
        %v448 = vld [vmem:[%s300 + $0x8] sm:$0xf]
        %v449 = vld [vmem:[%s300 + $0xc] sm:$0xf]
        %v450 = vld [vmem:[%s300 + $0x10] sm:$0xf]
        %v451 = vsel %vm388, %v446, 0.0
        %452 = vadd.xlane.f32.xlu0 %v451
        %v453 = vpop.xlane.xlu0 %452
        %v454 = vsel %vm388, %v447, 0.0
        %455 = vadd.xlane.f32.xlu0 %v454
        %v456 = vpop.xlane.xlu0 %455
        %v457 = vsel %vm388, %v448, 0.0
        %458 = vadd.xlane.f32.xlu0 %v457
        %v459 = vpop.xlane.xlu0 %458
        %v460 = vsel %vm388, %v449, 0.0
        %461 = vadd.xlane.f32.xlu0 %v460
        %v462 = vpop.xlane.xlu0 %461
        %v463 = vsel %vm388, %v450, 0.0
        %464 = vadd.xlane.f32.xlu0 %v463
        %v465 = vpop.xlane.xlu0 %464
        %v471 = vlaneseq
        %v472 = vshrl.u32 %v471, 7
        %v473 = vsub.s32 %v410, %v472
        %v474 = vrot.slane %v453, %v473
        %v475 = vlaneseq
        %v476 = vshrl.u32 %v475, 7
        %v477 = vsub.s32 %v410, %v476
        %v478 = vrot.slane %v456, %v477
        %v479 = vlaneseq
        %v480 = vshrl.u32 %v479, 7
        %v481 = vsub.s32 %v410, %v480
        %v482 = vrot.slane %v459, %v481
        %v483 = vlaneseq
        %v484 = vshrl.u32 %v483, 7
        %v485 = vsub.s32 %v410, %v484
        %v486 = vrot.slane %v462, %v485
        %v487 = vlaneseq
        %v488 = vshrl.u32 %v487, 7
        %v489 = vsub.s32 %v410, %v488
        %v490 = vrot.slane %v465, %v489
        %v491 = vsel %vm431, %v478, %v474
        %v492 = vsel %vm433, %v482, %v491
        %v493 = vsel %vm435, %v486, %v492
        %v494 = vsel %vm437, %v490, %v493
        %v496 = vsel %vm440, %v494, 0.0
        %497 = vadd.xlane.f32.xlu0 %v496
        %v498 = vpop.xlane.xlu0 %497
        %vm499 = vcmask 12296
        %500 = vst.msk [vmem:[%s195] sm:$0x1f] %vm499, %v498
        %v501 = vld [vmem:[%s316] sm:$0xf]
        %v502 = vld [vmem:[%s316 + $0x4] sm:$0xf]
        %v503 = vld [vmem:[%s316 + $0x8] sm:$0xf]
        %v504 = vld [vmem:[%s316 + $0xc] sm:$0xf]
        %v505 = vld [vmem:[%s316 + $0x10] sm:$0xf]
        %v506 = vsel %vm388, %v501, 0.0
        %507 = vadd.xlane.f32.xlu0 %v506
        %v508 = vpop.xlane.xlu0 %507
        %v509 = vsel %vm388, %v502, 0.0
        %510 = vadd.xlane.f32.xlu0 %v509
        %v511 = vpop.xlane.xlu0 %510
        %v512 = vsel %vm388, %v503, 0.0
        %513 = vadd.xlane.f32.xlu0 %v512
        %v514 = vpop.xlane.xlu0 %513
        %v515 = vsel %vm388, %v504, 0.0
        %516 = vadd.xlane.f32.xlu0 %v515
        %v517 = vpop.xlane.xlu0 %516
        %v518 = vsel %vm388, %v505, 0.0
        %519 = vadd.xlane.f32.xlu0 %v518
        %v520 = vpop.xlane.xlu0 %519
        %v526 = vlaneseq
        %v527 = vshrl.u32 %v526, 7
        %v528 = vsub.s32 %v410, %v527
        %v529 = vrot.slane %v508, %v528
        %v530 = vlaneseq
        %v531 = vshrl.u32 %v530, 7
        %v532 = vsub.s32 %v410, %v531
        %v533 = vrot.slane %v511, %v532
        %v534 = vlaneseq
        %v535 = vshrl.u32 %v534, 7
        %v536 = vsub.s32 %v410, %v535
        %v537 = vrot.slane %v514, %v536
        %v538 = vlaneseq
        %v539 = vshrl.u32 %v538, 7
        %v540 = vsub.s32 %v410, %v539
        %v541 = vrot.slane %v517, %v540
        %v542 = vlaneseq
        %v543 = vshrl.u32 %v542, 7
        %v544 = vsub.s32 %v410, %v543
        %v545 = vrot.slane %v520, %v544
        %v546 = vsel %vm431, %v533, %v529
        %v547 = vsel %vm433, %v537, %v546
        %v548 = vsel %vm435, %v541, %v547
        %v549 = vsel %vm437, %v545, %v548
        %v551 = vsel %vm440, %v549, 0.0
        %552 = vadd.xlane.f32.xlu0 %v551
        %v553 = vpop.xlane.xlu0 %552
        %vm554 = vcmask 20496
        %555 = vst.msk [vmem:[%s195] sm:$0x1f] %vm554, %v553
        %v556 = vld [vmem:[%s332] sm:$0xf]
        %v557 = vld [vmem:[%s332 + $0x4] sm:$0xf]
        %v558 = vld [vmem:[%s332 + $0x8] sm:$0xf]
        %v559 = vld [vmem:[%s332 + $0xc] sm:$0xf]
        %v560 = vld [vmem:[%s332 + $0x10] sm:$0xf]
        %v561 = vsel %vm388, %v556, 0.0
        %562 = vadd.xlane.f32.xlu0 %v561
        %v563 = vpop.xlane.xlu0 %562
        %v564 = vsel %vm388, %v557, 0.0
        %565 = vadd.xlane.f32.xlu0 %v564
        %v566 = vpop.xlane.xlu0 %565
        %v567 = vsel %vm388, %v558, 0.0
        %568 = vadd.xlane.f32.xlu0 %v567
        %v569 = vpop.xlane.xlu0 %568
        %v570 = vsel %vm388, %v559, 0.0
        %571 = vadd.xlane.f32.xlu0 %v570
        %v572 = vpop.xlane.xlu0 %571
        %v573 = vsel %vm388, %v560, 0.0
        %574 = vadd.xlane.f32.xlu0 %v573
        %v575 = vpop.xlane.xlu0 %574
        %v581 = vlaneseq
        %v582 = vshrl.u32 %v581, 7
        %v583 = vsub.s32 %v410, %v582
        %v584 = vrot.slane %v563, %v583
        %v585 = vlaneseq
        %v586 = vshrl.u32 %v585, 7
        %v587 = vsub.s32 %v410, %v586
        %v588 = vrot.slane %v566, %v587
        %v589 = vlaneseq
        %v590 = vshrl.u32 %v589, 7
        %v591 = vsub.s32 %v410, %v590
        %v592 = vrot.slane %v569, %v591
        %v593 = vlaneseq
        %v594 = vshrl.u32 %v593, 7
        %v595 = vsub.s32 %v410, %v594
        %v596 = vrot.slane %v572, %v595
        %v597 = vlaneseq
        %v598 = vshrl.u32 %v597, 7
        %v599 = vsub.s32 %v410, %v598
        %v600 = vrot.slane %v575, %v599
        %v601 = vsel %vm431, %v588, %v584
        %v602 = vsel %vm433, %v592, %v601
        %v603 = vsel %vm435, %v596, %v602
        %v604 = vsel %vm437, %v600, %v603
        %v606 = vsel %vm440, %v604, 0.0
        %607 = vadd.xlane.f32.xlu0 %v606
        %v608 = vpop.xlane.xlu0 %607
        %vm609 = vcmask 28696
        %610 = vst.msk [vmem:[%s195] sm:$0x1f] %vm609, %v608
        %v611 = vld [vmem:[%s348] sm:$0xf]
        %v612 = vld [vmem:[%s348 + $0x4] sm:$0xf]
        %v613 = vld [vmem:[%s348 + $0x8] sm:$0xf]
        %v614 = vld [vmem:[%s348 + $0xc] sm:$0xf]
        %v615 = vld [vmem:[%s348 + $0x10] sm:$0xf]
        %v616 = vsel %vm388, %v611, 0.0
        %617 = vadd.xlane.f32.xlu0 %v616
        %v618 = vpop.xlane.xlu0 %617
        %v619 = vsel %vm388, %v612, 0.0
        %620 = vadd.xlane.f32.xlu0 %v619
        %v621 = vpop.xlane.xlu0 %620
        %v622 = vsel %vm388, %v613, 0.0
        %623 = vadd.xlane.f32.xlu0 %v622
        %v624 = vpop.xlane.xlu0 %623
        %v625 = vsel %vm388, %v614, 0.0
        %626 = vadd.xlane.f32.xlu0 %v625
        %v627 = vpop.xlane.xlu0 %626
        %v628 = vsel %vm388, %v615, 0.0
        %629 = vadd.xlane.f32.xlu0 %v628
        %v630 = vpop.xlane.xlu0 %629
        %v636 = vlaneseq
        %v637 = vshrl.u32 %v636, 7
        %v638 = vsub.s32 %v410, %v637
        %v639 = vrot.slane %v618, %v638
        %v640 = vlaneseq
        %v641 = vshrl.u32 %v640, 7
        %v642 = vsub.s32 %v410, %v641
        %v643 = vrot.slane %v621, %v642
        %v644 = vlaneseq
        %v645 = vshrl.u32 %v644, 7
        %v646 = vsub.s32 %v410, %v645
        %v647 = vrot.slane %v624, %v646
        %v648 = vlaneseq
        %v649 = vshrl.u32 %v648, 7
        %v650 = vsub.s32 %v410, %v649
        %v651 = vrot.slane %v627, %v650
        %v652 = vlaneseq
        %v653 = vshrl.u32 %v652, 7
        %v654 = vsub.s32 %v410, %v653
        %v655 = vrot.slane %v630, %v654
        %v656 = vsel %vm431, %v643, %v639
        %v657 = vsel %vm433, %v647, %v656
        %v658 = vsel %vm435, %v651, %v657
        %v659 = vsel %vm437, %v655, %v658
        %v661 = vsel %vm440, %v659, 0.0
        %662 = vadd.xlane.f32.xlu0 %v661
        %v663 = vpop.xlane.xlu0 %662
        %vm664 = vcmask 36896
        %665 = vst.msk [vmem:[%s195] sm:$0x1f] %vm664, %v663
        %v666 = vld [vmem:[%s364] sm:$0xf]
        %v667 = vld [vmem:[%s364 + $0x4] sm:$0xf]
        %v668 = vld [vmem:[%s364 + $0x8] sm:$0xf]
        %v669 = vld [vmem:[%s364 + $0xc] sm:$0xf]
        %v670 = vld [vmem:[%s364 + $0x10] sm:$0xf]
        %v671 = vsel %vm388, %v666, 0.0
        %672 = vadd.xlane.f32.xlu0 %v671
        %v673 = vpop.xlane.xlu0 %672
        %v674 = vsel %vm388, %v667, 0.0
        %675 = vadd.xlane.f32.xlu0 %v674
        %v676 = vpop.xlane.xlu0 %675
        %v677 = vsel %vm388, %v668, 0.0
        %678 = vadd.xlane.f32.xlu0 %v677
        %v679 = vpop.xlane.xlu0 %678
        %v680 = vsel %vm388, %v669, 0.0
        %681 = vadd.xlane.f32.xlu0 %v680
        %v682 = vpop.xlane.xlu0 %681
        %v683 = vsel %vm388, %v670, 0.0
        %684 = vadd.xlane.f32.xlu0 %v683
        %v685 = vpop.xlane.xlu0 %684
        %v691 = vlaneseq
        %v692 = vshrl.u32 %v691, 7
        %v693 = vsub.s32 %v410, %v692
        %v694 = vrot.slane %v673, %v693
        %v695 = vlaneseq
        %v696 = vshrl.u32 %v695, 7
        %v697 = vsub.s32 %v410, %v696
        %v698 = vrot.slane %v676, %v697
        %v699 = vlaneseq
        %v700 = vshrl.u32 %v699, 7
        %v701 = vsub.s32 %v410, %v700
        %v702 = vrot.slane %v679, %v701
        %v703 = vlaneseq
        %v704 = vshrl.u32 %v703, 7
        %v705 = vsub.s32 %v410, %v704
        %v706 = vrot.slane %v682, %v705
        %v707 = vlaneseq
        %v708 = vshrl.u32 %v707, 7
        %v709 = vsub.s32 %v410, %v708
        %v710 = vrot.slane %v685, %v709
        %v711 = vsel %vm431, %v698, %v694
        %v712 = vsel %vm433, %v702, %v711
        %v713 = vsel %vm435, %v706, %v712
        %v714 = vsel %vm437, %v710, %v713
        %v716 = vsel %vm440, %v714, 0.0
        %717 = vadd.xlane.f32.xlu0 %v716
        %v718 = vpop.xlane.xlu0 %717
        %vm719 = vcmask 45096
        %720 = vst.msk [vmem:[%s195] sm:$0x1f] %vm719, %v718
      $region36: #{_loss_impl.2} parent=27 // pred_fallthru
        _
      %p721 = scmp.lt.s32.totalorder %s17, 1
      %s722 = scalar_select %p721, %s17, 1
      %s723 = smul.addr %s722, 8
      %s724 = scalar_lea.vmem %s2, %s723
      // Predicated region
      $region37: #{_loss_impl.2} parent=27 // pred_check
        %p725 = pneg %p99
      $region38: #{_loss_impl.2} parent=27 // pred_check_branch
        %727 = sbr.rel (%p725) target = $region40
      $region39: #{_loss_impl.2} parent=27 // pred_region
        _
      $region40: #{_loss_impl.2} parent=27 // pred_fallthru
        _
    $region28: #{_loss_impl.2} parent=5 // pred_fallthru
      _
    %p728 = scmp.le.s32.totalorder 2, %s8
    // Predicated region
    $region41: #{_loss_impl.2} parent=5 // pred_check
      %p729 = pneg %p728
    $region42: #{_loss_impl.2} parent=5 // pred_check_branch
      %731 = sbr.rel (%p729) target = $region44
    $region43: #{_loss_impl.2} parent=5 // pred_region
      %s732 = ssub.s32 %s8, 2
      // Predicated region
      $region45: #{_loss_impl.2} parent=43 // pred_check
        %p733 = pneg %p105
      $region46: #{_loss_impl.2} parent=43 // pred_check_branch
        %735 = sbr.rel (%p733) target = $region48
      $region47: #{_loss_impl.2} parent=43 // pred_region
        %p736 = scmp.lt.s32.totalorder %s19, 1
        %s737 = scalar_select %p736, %s19, 1
        %s738 = smul.addr %s737, 8
        %s739 = scalar_lea.vmem %s2, %s738
      $region48: #{_loss_impl.2} parent=43 // pred_fallthru
        _
    $region44: #{_loss_impl.2} parent=5 // pred_fallthru
      _
  $region6: #{_loss_impl.2} parent=0 // loop_footer
    %s12 = sadd.s32 1, %s8
  $region7: #{_loss_impl.2} parent=0 // loop_footer_branch
    %7 = sbr.rel target = $region3
  $region8: #{_loss_impl.2} parent=0 // loop_exit
    _

// kernel: _loss_impl.3
$region0: #{_loss_impl.3}
  #allocation0 [shape = 'u32[]', space=smem, size = 0x4, offset = 0x4, fixed_abs, tag = 'smem constant byte address 0x4 - core index']
  #allocation1 [shape = 'u32[144,128]{1,0:T(1,128)}', space=vmem, size = 0x12000, scoped, tag = 'internal scratch']
  #allocation2 [shape = 'f32[6,5,2,128]{3,2,1,0:T(2,128)}', space=vmem, size = 0x7800, scoped, tag = 'scratch operand']
  %s0 = inlined_call_operand.vmem [shape: f32[2,5,2,128], index: 0, kind: input, shape index: {}]
  %s1 = inlined_call_operand.vmem [shape: f32[2,5,2,128], index: 1, kind: input, shape index: {}]
  %s2 = inlined_call_operand.vmem [shape: f32[2,5,6], index: 2, kind: output, shape index: {}]
  %s3 = sld [smem:[#allocation0]]
  $region49: #{_loss_impl.3} parent=0
    _
  %s5 = ssub.s32 1, %s3
  %s6 = scalar_select 0, %s5, %s3
  loop: start=0, step=1, limit=4
  $region2: #{_loss_impl.3} parent=0 // loop_pre_header
    _
  $region3: #{_loss_impl.3} parent=0 // loop_header
    %s8 = sphi 0, %s12
    %p9 = scmp.ge.s32.totalorder %s8, 4
    %s15 = sphi 0, %s27
    %s16 = sphi 0, %s23
    %s17 = sphi 0, %s15
    %s18 = sphi 0, %s16
    %s19 = sphi 0, %s17
    %s20 = sphi 0, %s18
    %s32 = sphi 0, %s34
    %s35 = sphi 0, %s32
    %s36 = sphi 0, %s35
    %s52 = sphi 0, %s36
    %s60 = sphi 0, %s62
    %s63 = sphi 0, %s60
    %s64 = sphi 0, %s63
    %s80 = sphi 0, %s64
    %s86 = sphi 0, %s88
    %s89 = sphi 0, %s86
    %s90 = sphi 0, %s89
    %s106 = sphi 0, %s90
  $region4: #{_loss_impl.3} parent=0 // loop_header_branch
    %11 = sbr.rel (%p9) target = $region8
  $region5: #{_loss_impl.3} parent=0 // loop_body
    %s13 = ssub.s32 %s8, 1
    %s14 = ssub.s32 %s8, 2
    %s21 = sadd.s32 1, %s16
    %p22 = scmp.ge.s32.totalorder %s21, 1
    %s23 = scalar_select %p22, 0, %s21
    %s24 = sadd.s32 1, %s15
    %s25 = scalar_select %p22, %s24, %s15
    %p26 = scmp.ge.s32.totalorder %s25, 2
    %s27 = scalar_select %p26, 0, %s25
    %s28 = ssub.s32 %s15, %s27
    %s29 = ssub.s32 %s16, %s23
    %s30 = sor.u32 %s28, %s29
    %p31 = scmp.eq.s32.totalorder %s30, 0
    %s33 = sadd.s32 %s32, 1
    %s34 = scalar_select %p31, %s32, %s33
    %p37 = pneg %p31
    %p38 = scmp.eq.s32.totalorder %s8, 1
    %p39 = por %p37, %p38
    %p40 = scmp.ne.s32.totalorder %s32, %s35
    %p41 = scmp.eq.s32.totalorder %s8, 0
    %p42 = por %p40, %p41
    %p43 = scmp.ne.s32.totalorder %s32, %s35
    %p44 = scmp.eq.s32.totalorder %s13, 1
    %p45 = por %p43, %p44
    %p46 = scmp.ne.s32.totalorder %s35, %s36
    %p47 = scmp.eq.s32.totalorder %s13, 0
    %p48 = por %p46, %p47
    %p49 = scmp.ne.s32.totalorder %s35, %s36
    %p50 = scmp.eq.s32.totalorder %s14, 1
    %p51 = por %p49, %p50
    %p53 = scmp.ne.s32.totalorder %s36, %s52
    %p54 = scmp.eq.s32.totalorder %s14, 0
    %p55 = por %p53, %p54
    %s56 = ssub.s32 %s15, %s27
    %s57 = ssub.s32 %s16, %s23
    %s58 = sor.u32 %s56, %s57
    %p59 = scmp.eq.s32.totalorder %s58, 0
    %s61 = sadd.s32 %s60, 1
    %s62 = scalar_select %p59, %s60, %s61
    %p65 = pneg %p59
    %p66 = scmp.eq.s32.totalorder %s8, 1
    %p67 = por %p65, %p66
    %p68 = scmp.ne.s32.totalorder %s60, %s63
    %p69 = scmp.eq.s32.totalorder %s8, 0
    %p70 = por %p68, %p69
    %p71 = scmp.ne.s32.totalorder %s60, %s63
    %p72 = scmp.eq.s32.totalorder %s13, 1
    %p73 = por %p71, %p72
    %p74 = scmp.ne.s32.totalorder %s63, %s64
    %p75 = scmp.eq.s32.totalorder %s13, 0
    %p76 = por %p74, %p75
    %p77 = scmp.ne.s32.totalorder %s63, %s64
    %p78 = scmp.eq.s32.totalorder %s14, 1
    %p79 = por %p77, %p78
    %p81 = scmp.ne.s32.totalorder %s64, %s80
    %p82 = scmp.eq.s32.totalorder %s14, 0
    %p83 = por %p81, %p82
    %s84 = ssub.s32 %s15, %s27
    %p85 = scmp.eq.s32.totalorder %s84, 0
    %s87 = sadd.s32 %s86, 1
    %s88 = scalar_select %p85, %s86, %s87
    %p91 = pneg %p85
    %p92 = scmp.eq.s32.totalorder %s8, 1
    %p93 = por %p91, %p92
    %p94 = scmp.ne.s32.totalorder %s86, %s89
    %p95 = scmp.eq.s32.totalorder %s8, 0
    %p96 = por %p94, %p95
    %p97 = scmp.ne.s32.totalorder %s86, %s89
    %p98 = scmp.eq.s32.totalorder %s13, 1
    %p99 = por %p97, %p98
    %p100 = scmp.ne.s32.totalorder %s89, %s90
    %p101 = scmp.eq.s32.totalorder %s13, 0
    %p102 = por %p100, %p101
    %p103 = scmp.ne.s32.totalorder %s89, %s90
    %p104 = scmp.eq.s32.totalorder %s14, 1
    %p105 = por %p103, %p104
    %p107 = scmp.ne.s32.totalorder %s90, %s106
    %p108 = scmp.eq.s32.totalorder %s14, 0
    %p109 = por %p107, %p108
    %p110 = scmp.le.s32.totalorder 1, %s8
    %p111 = scmp.lt.s32.totalorder %s8, 3
    %p112 = pnand %p110, %p111
    %p113 = pneg %p112
    // Predicated region
    $region9: #{_loss_impl.3} parent=5 // pred_check
      _
    $region10: #{_loss_impl.3} parent=5 // pred_check_branch
      %115 = sbr.rel (%p112) target = $region12
    $region11: #{_loss_impl.3} parent=5 // pred_region
      %s116 = ssub.s32 %s8, 1
    $region12: #{_loss_impl.3} parent=5 // pred_fallthru
      _
    %p117 = scmp.lt.s32.totalorder %s8, 2
    // Predicated region
    $region13: #{_loss_impl.3} parent=5 // pred_check
      %p118 = pneg %p117
    $region14: #{_loss_impl.3} parent=5 // pred_check_branch
      %120 = sbr.rel (%p118) target = $region16
    $region15: #{_loss_impl.3} parent=5 // pred_region
      // Predicated region
      $region17: #{_loss_impl.3} parent=15 // pred_check
        %p121 = pneg %p42
      $region18: #{_loss_impl.3} parent=15 // pred_check_branch
        %123 = sbr.rel (%p121) target = $region20
      $region19: #{_loss_impl.3} parent=15 // pred_region
        %p124 = scmp.lt.s32.totalorder %s15, 1
        %s125 = scalar_select %p124, %s15, 1
        %p126 = scmp.lt.s32.totalorder %s16, 0
        %s127 = scalar_select %p126, %s16, 0
        %s128 = smul.addr %s125, 5
        %s129 = sadd.s32 %s127, %s128
        %s130 = smul.addr %s129, 2
        %s131 = scalar_lea.vmem %s0, %s130
      $region20: #{_loss_impl.3} parent=15 // pred_fallthru
        _
      // Predicated region
      $region21: #{_loss_impl.3} parent=15 // pred_check
        %p132 = pneg %p70
      $region22: #{_loss_impl.3} parent=15 // pred_check_branch
        %134 = sbr.rel (%p132) target = $region24
      $region23: #{_loss_impl.3} parent=15 // pred_region
        %p135 = scmp.lt.s32.totalorder %s15, 1
        %s136 = scalar_select %p135, %s15, 1
        %p137 = scmp.lt.s32.totalorder %s16, 0
        %s138 = scalar_select %p137, %s16, 0
        %s139 = smul.addr %s136, 5
        %s140 = sadd.s32 %s138, %s139
        %s141 = smul.addr %s140, 2
        %s142 = scalar_lea.vmem %s1, %s141
      $region24: #{_loss_impl.3} parent=15 // pred_fallthru
        _
    $region16: #{_loss_impl.3} parent=5 // pred_fallthru
      _
    %p143 = scmp.le.s32.totalorder 1, %s8
    %p144 = scmp.lt.s32.totalorder %s8, 3
    %p145 = pnand %p143, %p144
    %p146 = pneg %p145
    // Predicated region
    $region25: #{_loss_impl.3} parent=5 // pred_check
      _
    $region26: #{_loss_impl.3} parent=5 // pred_check_branch
      %148 = sbr.rel (%p145) target = $region28
    $region27: #{_loss_impl.3} parent=5 // pred_region
      %s149 = ssub.s32 %s8, 1
      %p150 = scmp.lt.s32.totalorder %s17, 1
      %s151 = scalar_select %p150, %s17, 1
      %p152 = scmp.lt.s32.totalorder %s18, 0
      %s153 = scalar_select %p152, %s18, 0
      %s154 = smul.addr %s151, 5
      %s155 = sadd.s32 %s153, %s154
      %s156 = smul.addr %s155, 2
      %s157 = scalar_lea.vmem %s0, %s156
      %p158 = pneg %p48
      %p159 = pneg %p45
      %p160 = scmp.lt.s32.totalorder %s17, 1
      %s161 = scalar_select %p160, %s17, 1
      %p162 = scmp.lt.s32.totalorder %s18, 0
      %s163 = scalar_select %p162, %s18, 0
      %s164 = smul.addr %s161, 5
      %s165 = sadd.s32 %s163, %s164
      %s166 = smul.addr %s165, 2
      %s167 = scalar_lea.vmem %s1, %s166
      %p168 = pneg %p76
      %p169 = pneg %p73
      %p170 = pneg %p102
      %p171 = pneg %p99
      %p172 = scmp.lt.s32.totalorder %s17, 1
      %s173 = scalar_select %p172, %s17, 1
      %s174 = smul.addr %s173, 8
      %s175 = scalar_lea.vmem %s2, %s174
      %p176 = scmp.lt.s32.totalorder %s17, 1
      %s177 = scalar_select %p176, %s17, 1
      %p178 = scmp.lt.s32.totalorder %s18, 0
      %s179 = scalar_select %p178, %s18, 0
      %s180 = smul.addr %s177, 5
      %s181 = sadd.s32 %s179, %s180
      %s182 = smul.addr %s181, 2
      %s183 = scalar_lea.vmem %s0, %s182
      %p184 = scmp.lt.s32.totalorder %s17, 1
      %s185 = scalar_select %p184, %s17, 1
      %p186 = scmp.lt.s32.totalorder %s18, 0
      %s187 = scalar_select %p186, %s18, 0
      %s188 = smul.addr %s185, 5
      %s189 = sadd.s32 %s187, %s188
      %s190 = smul.addr %s189, 2
      %s191 = scalar_lea.vmem %s1, %s190
      %p192 = scmp.lt.s32.totalorder %s17, 1
      %s193 = scalar_select %p192, %s17, 1
      %s194 = smul.addr %s193, 8
      %s195 = scalar_lea.vmem %s2, %s194
      %p196 = scmp.eq.s32.totalorder %s18, 0
      // Predicated region
      $region29: #{_loss_impl.3} parent=27 // pred_check
        %p197 = pneg %p196
      $region30: #{_loss_impl.3} parent=27 // pred_check_branch
        %199 = sbr.rel (%p197) target = $region32
      $region31: #{_loss_impl.3} parent=27 // pred_region
        %200 = vst [vmem:[#allocation2] sm:$0x3] 0.0
        %201 = vst [vmem:[#allocation2 + $0x2] sm:$0x3] 0.0
        %202 = vst [vmem:[#allocation2 + $0x4] sm:$0x3] 0.0
        %203 = vst [vmem:[#allocation2 + $0x6] sm:$0x3] 0.0
        %204 = vst [vmem:[#allocation2 + $0x8] sm:$0x3] 0.0
        %205 = vst [vmem:[#allocation2 + $0xa] sm:$0x3] 0.0
        %206 = vst [vmem:[#allocation2 + $0xc] sm:$0x3] 0.0
        %207 = vst [vmem:[#allocation2 + $0xe] sm:$0x3] 0.0
        %208 = vst [vmem:[#allocation2 + $0x10] sm:$0x3] 0.0
        %209 = vst [vmem:[#allocation2 + $0x12] sm:$0x3] 0.0
        %210 = vst [vmem:[#allocation2 + $0x14] sm:$0x3] 0.0
        %211 = vst [vmem:[#allocation2 + $0x16] sm:$0x3] 0.0
        %212 = vst [vmem:[#allocation2 + $0x18] sm:$0x3] 0.0
        %213 = vst [vmem:[#allocation2 + $0x1a] sm:$0x3] 0.0
        %214 = vst [vmem:[#allocation2 + $0x1c] sm:$0x3] 0.0
        %215 = vst [vmem:[#allocation2 + $0x1e] sm:$0x3] 0.0
        %216 = vst [vmem:[#allocation2 + $0x20] sm:$0x3] 0.0
        %217 = vst [vmem:[#allocation2 + $0x22] sm:$0x3] 0.0
        %218 = vst [vmem:[#allocation2 + $0x24] sm:$0x3] 0.0
        %219 = vst [vmem:[#allocation2 + $0x26] sm:$0x3] 0.0
        %220 = vst [vmem:[#allocation2 + $0x28] sm:$0x3] 0.0
        %221 = vst [vmem:[#allocation2 + $0x2a] sm:$0x3] 0.0
        %222 = vst [vmem:[#allocation2 + $0x2c] sm:$0x3] 0.0
        %223 = vst [vmem:[#allocation2 + $0x2e] sm:$0x3] 0.0
        %224 = vst [vmem:[#allocation2 + $0x30] sm:$0x3] 0.0
        %225 = vst [vmem:[#allocation2 + $0x32] sm:$0x3] 0.0
        %226 = vst [vmem:[#allocation2 + $0x34] sm:$0x3] 0.0
        %227 = vst [vmem:[#allocation2 + $0x36] sm:$0x3] 0.0
        %228 = vst [vmem:[#allocation2 + $0x38] sm:$0x3] 0.0
        %229 = vst [vmem:[#allocation2 + $0x3a] sm:$0x3] 0.0
      $region32: #{_loss_impl.3} parent=27 // pred_fallthru
        _
      %v230 = vld [vmem:[%s183] sm:$0x3]
      %v231 = vld [vmem:[%s183 + $0x2] sm:$0x3]
      %v232 = vld [vmem:[%s183 + $0x4] sm:$0x3]
      %v233 = vld [vmem:[%s183 + $0x6] sm:$0x3]
      %v234 = vld [vmem:[%s183 + $0x8] sm:$0x3]
      %v235 = vld [vmem:[%s191] sm:$0x3]
      %v236 = vld [vmem:[%s191 + $0x2] sm:$0x3]
      %v237 = vld [vmem:[%s191 + $0x4] sm:$0x3]
      %v238 = vld [vmem:[%s191 + $0x6] sm:$0x3]
      %v239 = vld [vmem:[%s191 + $0x8] sm:$0x3]
      %v240 = vsub.f32 0.0, %v235
      %v241 = vsub.f32 0.0, %v236
      %v242 = vsub.f32 0.0, %v237
      %v243 = vsub.f32 0.0, %v238
      %v244 = vsub.f32 0.0, %v239
      %v245 = vmax.f32 %v230, 1e-05
      %v246 = vmax.f32 %v231, 1e-05
      %v247 = vmax.f32 %v232, 1e-05
      %v248 = vmax.f32 %v233, 1e-05
      %v249 = vmax.f32 %v234, 1e-05
      %v250 = vlog2.pop %v245
      %v251 = vmul.f32 %v250, 0.6931472
      %v252 = vlog2.pop %v246
      %v253 = vmul.f32 %v252, 0.6931472
      %v254 = vlog2.pop %v247
      %v255 = vmul.f32 %v254, 0.6931472
      %v256 = vlog2.pop %v248
      %v257 = vmul.f32 %v256, 0.6931472
      %v258 = vlog2.pop %v249
      %v259 = vmul.f32 %v258, 0.6931472
      %v260 = vmul.f32 %v240, %v251
      %v261 = vmul.f32 %v241, %v253
      %v262 = vmul.f32 %v242, %v255
      %v263 = vmul.f32 %v243, %v257
      %v264 = vmul.f32 %v244, %v259
      %v265 = vmul.f32 %v235, %v230
      %v266 = vmul.f32 %v236, %v231
      %v267 = vmul.f32 %v237, %v232
      %v268 = vmul.f32 %v238, %v233
      %v269 = vmul.f32 %v239, %v234
      %vm270 = vcmp.gt.f32.partialorder %v230, 0.5
      %vm271 = vcmp.gt.f32.partialorder %v231, 0.5
      %vm272 = vcmp.gt.f32.partialorder %v232, 0.5
      %vm273 = vcmp.gt.f32.partialorder %v233, 0.5
      %vm274 = vcmp.gt.f32.partialorder %v234, 0.5
      %v275 = vsel %vm270, 1.0, 0.0
      %v276 = vsel %vm271, 1.0, 0.0
      %v277 = vsel %vm272, 1.0, 0.0
      %v278 = vsel %vm273, 1.0, 0.0
      %v279 = vsel %vm274, 1.0, 0.0
      %v280 = vmul.f32 %v235, %v275
      %v281 = vmul.f32 %v236, %v276
      %v282 = vmul.f32 %v237, %v277
      %v283 = vmul.f32 %v238, %v278
      %v284 = vmul.f32 %v239, %v279
      %v285 = vld [vmem:[#allocation2] sm:$0x3]
      %v286 = vld [vmem:[#allocation2 + $0x2] sm:$0x3]
      %v287 = vld [vmem:[#allocation2 + $0x4] sm:$0x3]
      %v288 = vld [vmem:[#allocation2 + $0x6] sm:$0x3]
      %v289 = vld [vmem:[#allocation2 + $0x8] sm:$0x3]
      %v290 = vadd.f32 %v285, %v260
      %v291 = vadd.f32 %v286, %v261
      %v292 = vadd.f32 %v287, %v262
      %v293 = vadd.f32 %v288, %v263
      %v294 = vadd.f32 %v289, %v264
      %295 = vst [vmem:[#allocation2] sm:$0x3] %v290
      %296 = vst [vmem:[#allocation2 + $0x2] sm:$0x3] %v291
      %297 = vst [vmem:[#allocation2 + $0x4] sm:$0x3] %v292
      %298 = vst [vmem:[#allocation2 + $0x6] sm:$0x3] %v293
      %299 = vst [vmem:[#allocation2 + $0x8] sm:$0x3] %v294
      %s300 = scalar_lea.vmem [#allocation2], 10
      %v301 = vld [vmem:[%s300] sm:$0x3]
      %v302 = vld [vmem:[%s300 + $0x2] sm:$0x3]
      %v303 = vld [vmem:[%s300 + $0x4] sm:$0x3]
      %v304 = vld [vmem:[%s300 + $0x6] sm:$0x3]
      %v305 = vld [vmem:[%s300 + $0x8] sm:$0x3]
      %v306 = vadd.f32 %v301, %v265
      %v307 = vadd.f32 %v302, %v266
      %v308 = vadd.f32 %v303, %v267
      %v309 = vadd.f32 %v304, %v268
      %v310 = vadd.f32 %v305, %v269
      %311 = vst [vmem:[%s300] sm:$0x3] %v306
      %312 = vst [vmem:[%s300 + $0x2] sm:$0x3] %v307
      %313 = vst [vmem:[%s300 + $0x4] sm:$0x3] %v308
      %314 = vst [vmem:[%s300 + $0x6] sm:$0x3] %v309
      %315 = vst [vmem:[%s300 + $0x8] sm:$0x3] %v310
      %s316 = scalar_lea.vmem [#allocation2], 20
      %v317 = vld [vmem:[%s316] sm:$0x3]
      %v318 = vld [vmem:[%s316 + $0x2] sm:$0x3]
      %v319 = vld [vmem:[%s316 + $0x4] sm:$0x3]
      %v320 = vld [vmem:[%s316 + $0x6] sm:$0x3]
      %v321 = vld [vmem:[%s316 + $0x8] sm:$0x3]
      %v322 = vadd.f32 %v317, %v230
      %v323 = vadd.f32 %v318, %v231
      %v324 = vadd.f32 %v319, %v232
      %v325 = vadd.f32 %v320, %v233
      %v326 = vadd.f32 %v321, %v234
      %327 = vst [vmem:[%s316] sm:$0x3] %v322
      %328 = vst [vmem:[%s316 + $0x2] sm:$0x3] %v323
      %329 = vst [vmem:[%s316 + $0x4] sm:$0x3] %v324
      %330 = vst [vmem:[%s316 + $0x6] sm:$0x3] %v325
      %331 = vst [vmem:[%s316 + $0x8] sm:$0x3] %v326
      %s332 = scalar_lea.vmem [#allocation2], 30
      %v333 = vld [vmem:[%s332] sm:$0x3]
      %v334 = vld [vmem:[%s332 + $0x2] sm:$0x3]
      %v335 = vld [vmem:[%s332 + $0x4] sm:$0x3]
      %v336 = vld [vmem:[%s332 + $0x6] sm:$0x3]
      %v337 = vld [vmem:[%s332 + $0x8] sm:$0x3]
      %v338 = vadd.f32 %v333, %v235
      %v339 = vadd.f32 %v334, %v236
      %v340 = vadd.f32 %v335, %v237
      %v341 = vadd.f32 %v336, %v238
      %v342 = vadd.f32 %v337, %v239
      %343 = vst [vmem:[%s332] sm:$0x3] %v338
      %344 = vst [vmem:[%s332 + $0x2] sm:$0x3] %v339
      %345 = vst [vmem:[%s332 + $0x4] sm:$0x3] %v340
      %346 = vst [vmem:[%s332 + $0x6] sm:$0x3] %v341
      %347 = vst [vmem:[%s332 + $0x8] sm:$0x3] %v342
      %s348 = scalar_lea.vmem [#allocation2], 40
      %v349 = vld [vmem:[%s348] sm:$0x3]
      %v350 = vld [vmem:[%s348 + $0x2] sm:$0x3]
      %v351 = vld [vmem:[%s348 + $0x4] sm:$0x3]
      %v352 = vld [vmem:[%s348 + $0x6] sm:$0x3]
      %v353 = vld [vmem:[%s348 + $0x8] sm:$0x3]
      %v354 = vadd.f32 %v349, %v280
      %v355 = vadd.f32 %v350, %v281
      %v356 = vadd.f32 %v351, %v282
      %v357 = vadd.f32 %v352, %v283
      %v358 = vadd.f32 %v353, %v284
      %359 = vst [vmem:[%s348] sm:$0x3] %v354
      %360 = vst [vmem:[%s348 + $0x2] sm:$0x3] %v355
      %361 = vst [vmem:[%s348 + $0x4] sm:$0x3] %v356
      %362 = vst [vmem:[%s348 + $0x6] sm:$0x3] %v357
      %363 = vst [vmem:[%s348 + $0x8] sm:$0x3] %v358
      %s364 = scalar_lea.vmem [#allocation2], 50
      %v365 = vld [vmem:[%s364] sm:$0x3]
      %v366 = vld [vmem:[%s364 + $0x2] sm:$0x3]
      %v367 = vld [vmem:[%s364 + $0x4] sm:$0x3]
      %v368 = vld [vmem:[%s364 + $0x6] sm:$0x3]
      %v369 = vld [vmem:[%s364 + $0x8] sm:$0x3]
      %v370 = vadd.f32 %v365, %v275
      %v371 = vadd.f32 %v366, %v276
      %v372 = vadd.f32 %v367, %v277
      %v373 = vadd.f32 %v368, %v278
      %v374 = vadd.f32 %v369, %v279
      %375 = vst [vmem:[%s364] sm:$0x3] %v370
      %376 = vst [vmem:[%s364 + $0x2] sm:$0x3] %v371
      %377 = vst [vmem:[%s364 + $0x4] sm:$0x3] %v372
      %378 = vst [vmem:[%s364 + $0x6] sm:$0x3] %v373
      %379 = vst [vmem:[%s364 + $0x8] sm:$0x3] %v374
      // Predicated region
      $region33: #{_loss_impl.3} parent=27 // pred_check
        %p380 = pneg %p196
      $region34: #{_loss_impl.3} parent=27 // pred_check_branch
        %382 = sbr.rel (%p380) target = $region36
      $region35: #{_loss_impl.3} parent=27 // pred_region
        %v383 = vld [vmem:[#allocation2] sm:$0x3]
        %v384 = vld [vmem:[#allocation2 + $0x2] sm:$0x3]
        %v385 = vld [vmem:[#allocation2 + $0x4] sm:$0x3]
        %v386 = vld [vmem:[#allocation2 + $0x6] sm:$0x3]
        %v387 = vld [vmem:[#allocation2 + $0x8] sm:$0x3]
        %vm388 = vcmask 1041408
        %v389 = vsel %vm388, %v383, 0.0
        %390 = vadd.xlane.f32.xlu0 %v389
        %v391 = vpop.xlane.xlu0 %390
        %v392 = vsel %vm388, %v384, 0.0
        %393 = vadd.xlane.f32.xlu0 %v392
        %v394 = vpop.xlane.xlu0 %393
        %v395 = vsel %vm388, %v385, 0.0
        %396 = vadd.xlane.f32.xlu0 %v395
        %v397 = vpop.xlane.xlu0 %396
        %v398 = vsel %vm388, %v386, 0.0
        %399 = vadd.xlane.f32.xlu0 %v398
        %v400 = vpop.xlane.xlu0 %399
        %v401 = vsel %vm388, %v387, 0.0
        %402 = vadd.xlane.f32.xlu0 %v401
        %v403 = vpop.xlane.xlu0 %402
        %v409 = vlaneseq
        %v410 = vand.u32 %v409, 127
        %v411 = vlaneseq
        %v412 = vshrl.u32 %v411, 7
        %v413 = vsub.s32 %v410, %v412
        %v414 = vrot.slane %v391, %v413
        %v415 = vlaneseq
        %v416 = vshrl.u32 %v415, 7
        %v417 = vsub.s32 %v410, %v416
        %v418 = vrot.slane %v394, %v417
        %v419 = vlaneseq
        %v420 = vshrl.u32 %v419, 7
        %v421 = vsub.s32 %v410, %v420
        %v422 = vrot.slane %v397, %v421
        %v423 = vlaneseq
        %v424 = vshrl.u32 %v423, 7
        %v425 = vsub.s32 %v410, %v424
        %v426 = vrot.slane %v400, %v425
        %v427 = vlaneseq
        %v428 = vshrl.u32 %v427, 7
        %v429 = vsub.s32 %v410, %v428
        %v430 = vrot.slane %v403, %v429
        %vm431 = vcmask 1041409
        %v432 = vsel %vm431, %v418, %v414
        %vm433 = vcmask 1042434
        %v434 = vsel %vm433, %v422, %v432
        %vm435 = vcmask 1043459
        %v436 = vsel %vm435, %v426, %v434
        %vm437 = vcmask 1044484
        %v438 = vsel %vm437, %v430, %v436
        %vm440 = vcmask 12288
        %v441 = vsel %vm440, %v438, 0.0
        %442 = vadd.xlane.f32.xlu0 %v441
        %v443 = vpop.xlane.xlu0 %442
        %vm444 = vcmask 4096
        %445 = vst.msk [vmem:[%s195] sm:$0x1f] %vm444, %v443
        %v446 = vld [vmem:[%s300] sm:$0x3]
        %v447 = vld [vmem:[%s300 + $0x2] sm:$0x3]
        %v448 = vld [vmem:[%s300 + $0x4] sm:$0x3]
        %v449 = vld [vmem:[%s300 + $0x6] sm:$0x3]
        %v450 = vld [vmem:[%s300 + $0x8] sm:$0x3]
        %v451 = vsel %vm388, %v446, 0.0
        %452 = vadd.xlane.f32.xlu0 %v451
        %v453 = vpop.xlane.xlu0 %452
        %v454 = vsel %vm388, %v447, 0.0
        %455 = vadd.xlane.f32.xlu0 %v454
        %v456 = vpop.xlane.xlu0 %455
        %v457 = vsel %vm388, %v448, 0.0
        %458 = vadd.xlane.f32.xlu0 %v457
        %v459 = vpop.xlane.xlu0 %458
        %v460 = vsel %vm388, %v449, 0.0
        %461 = vadd.xlane.f32.xlu0 %v460
        %v462 = vpop.xlane.xlu0 %461
        %v463 = vsel %vm388, %v450, 0.0
        %464 = vadd.xlane.f32.xlu0 %v463
        %v465 = vpop.xlane.xlu0 %464
        %v471 = vlaneseq
        %v472 = vshrl.u32 %v471, 7
        %v473 = vsub.s32 %v410, %v472
        %v474 = vrot.slane %v453, %v473
        %v475 = vlaneseq
        %v476 = vshrl.u32 %v475, 7
        %v477 = vsub.s32 %v410, %v476
        %v478 = vrot.slane %v456, %v477
        %v479 = vlaneseq
        %v480 = vshrl.u32 %v479, 7
        %v481 = vsub.s32 %v410, %v480
        %v482 = vrot.slane %v459, %v481
        %v483 = vlaneseq
        %v484 = vshrl.u32 %v483, 7
        %v485 = vsub.s32 %v410, %v484
        %v486 = vrot.slane %v462, %v485
        %v487 = vlaneseq
        %v488 = vshrl.u32 %v487, 7
        %v489 = vsub.s32 %v410, %v488
        %v490 = vrot.slane %v465, %v489
        %v491 = vsel %vm431, %v478, %v474
        %v492 = vsel %vm433, %v482, %v491
        %v493 = vsel %vm435, %v486, %v492
        %v494 = vsel %vm437, %v490, %v493
        %v496 = vsel %vm440, %v494, 0.0
        %497 = vadd.xlane.f32.xlu0 %v496
        %v498 = vpop.xlane.xlu0 %497
        %vm499 = vcmask 12296
        %500 = vst.msk [vmem:[%s195] sm:$0x1f] %vm499, %v498
        %v501 = vld [vmem:[%s316] sm:$0x3]
        %v502 = vld [vmem:[%s316 + $0x2] sm:$0x3]
        %v503 = vld [vmem:[%s316 + $0x4] sm:$0x3]
        %v504 = vld [vmem:[%s316 + $0x6] sm:$0x3]
        %v505 = vld [vmem:[%s316 + $0x8] sm:$0x3]
        %v506 = vsel %vm388, %v501, 0.0
        %507 = vadd.xlane.f32.xlu0 %v506
        %v508 = vpop.xlane.xlu0 %507
        %v509 = vsel %vm388, %v502, 0.0
        %510 = vadd.xlane.f32.xlu0 %v509
        %v511 = vpop.xlane.xlu0 %510
        %v512 = vsel %vm388, %v503, 0.0
        %513 = vadd.xlane.f32.xlu0 %v512
        %v514 = vpop.xlane.xlu0 %513
        %v515 = vsel %vm388, %v504, 0.0
        %516 = vadd.xlane.f32.xlu0 %v515
        %v517 = vpop.xlane.xlu0 %516
        %v518 = vsel %vm388, %v505, 0.0
        %519 = vadd.xlane.f32.xlu0 %v518
        %v520 = vpop.xlane.xlu0 %519
        %v526 = vlaneseq
        %v527 = vshrl.u32 %v526, 7
        %v528 = vsub.s32 %v410, %v527
        %v529 = vrot.slane %v508, %v528
        %v530 = vlaneseq
        %v531 = vshrl.u32 %v530, 7
        %v532 = vsub.s32 %v410, %v531
        %v533 = vrot.slane %v511, %v532
        %v534 = vlaneseq
        %v535 = vshrl.u32 %v534, 7
        %v536 = vsub.s32 %v410, %v535
        %v537 = vrot.slane %v514, %v536
        %v538 = vlaneseq
        %v539 = vshrl.u32 %v538, 7
        %v540 = vsub.s32 %v410, %v539
        %v541 = vrot.slane %v517, %v540
        %v542 = vlaneseq
        %v543 = vshrl.u32 %v542, 7
        %v544 = vsub.s32 %v410, %v543
        %v545 = vrot.slane %v520, %v544
        %v546 = vsel %vm431, %v533, %v529
        %v547 = vsel %vm433, %v537, %v546
        %v548 = vsel %vm435, %v541, %v547
        %v549 = vsel %vm437, %v545, %v548
        %v551 = vsel %vm440, %v549, 0.0
        %552 = vadd.xlane.f32.xlu0 %v551
        %v553 = vpop.xlane.xlu0 %552
        %vm554 = vcmask 20496
        %555 = vst.msk [vmem:[%s195] sm:$0x1f] %vm554, %v553
        %v556 = vld [vmem:[%s332] sm:$0x3]
        %v557 = vld [vmem:[%s332 + $0x2] sm:$0x3]
        %v558 = vld [vmem:[%s332 + $0x4] sm:$0x3]
        %v559 = vld [vmem:[%s332 + $0x6] sm:$0x3]
        %v560 = vld [vmem:[%s332 + $0x8] sm:$0x3]
        %v561 = vsel %vm388, %v556, 0.0
        %562 = vadd.xlane.f32.xlu0 %v561
        %v563 = vpop.xlane.xlu0 %562
        %v564 = vsel %vm388, %v557, 0.0
        %565 = vadd.xlane.f32.xlu0 %v564
        %v566 = vpop.xlane.xlu0 %565
        %v567 = vsel %vm388, %v558, 0.0
        %568 = vadd.xlane.f32.xlu0 %v567
        %v569 = vpop.xlane.xlu0 %568
        %v570 = vsel %vm388, %v559, 0.0
        %571 = vadd.xlane.f32.xlu0 %v570
        %v572 = vpop.xlane.xlu0 %571
        %v573 = vsel %vm388, %v560, 0.0
        %574 = vadd.xlane.f32.xlu0 %v573
        %v575 = vpop.xlane.xlu0 %574
        %v581 = vlaneseq
        %v582 = vshrl.u32 %v581, 7
        %v583 = vsub.s32 %v410, %v582
        %v584 = vrot.slane %v563, %v583
        %v585 = vlaneseq
        %v586 = vshrl.u32 %v585, 7
        %v587 = vsub.s32 %v410, %v586
        %v588 = vrot.slane %v566, %v587
        %v589 = vlaneseq
        %v590 = vshrl.u32 %v589, 7
        %v591 = vsub.s32 %v410, %v590
        %v592 = vrot.slane %v569, %v591
        %v593 = vlaneseq
        %v594 = vshrl.u32 %v593, 7
        %v595 = vsub.s32 %v410, %v594
        %v596 = vrot.slane %v572, %v595
        %v597 = vlaneseq
        %v598 = vshrl.u32 %v597, 7
        %v599 = vsub.s32 %v410, %v598
        %v600 = vrot.slane %v575, %v599
        %v601 = vsel %vm431, %v588, %v584
        %v602 = vsel %vm433, %v592, %v601
        %v603 = vsel %vm435, %v596, %v602
        %v604 = vsel %vm437, %v600, %v603
        %v606 = vsel %vm440, %v604, 0.0
        %607 = vadd.xlane.f32.xlu0 %v606
        %v608 = vpop.xlane.xlu0 %607
        %vm609 = vcmask 28696
        %610 = vst.msk [vmem:[%s195] sm:$0x1f] %vm609, %v608
        %v611 = vld [vmem:[%s348] sm:$0x3]
        %v612 = vld [vmem:[%s348 + $0x2] sm:$0x3]
        %v613 = vld [vmem:[%s348 + $0x4] sm:$0x3]
        %v614 = vld [vmem:[%s348 + $0x6] sm:$0x3]
        %v615 = vld [vmem:[%s348 + $0x8] sm:$0x3]
        %v616 = vsel %vm388, %v611, 0.0
        %617 = vadd.xlane.f32.xlu0 %v616
        %v618 = vpop.xlane.xlu0 %617
        %v619 = vsel %vm388, %v612, 0.0
        %620 = vadd.xlane.f32.xlu0 %v619
        %v621 = vpop.xlane.xlu0 %620
        %v622 = vsel %vm388, %v613, 0.0
        %623 = vadd.xlane.f32.xlu0 %v622
        %v624 = vpop.xlane.xlu0 %623
        %v625 = vsel %vm388, %v614, 0.0
        %626 = vadd.xlane.f32.xlu0 %v625
        %v627 = vpop.xlane.xlu0 %626
        %v628 = vsel %vm388, %v615, 0.0
        %629 = vadd.xlane.f32.xlu0 %v628
        %v630 = vpop.xlane.xlu0 %629
        %v636 = vlaneseq
        %v637 = vshrl.u32 %v636, 7
        %v638 = vsub.s32 %v410, %v637
        %v639 = vrot.slane %v618, %v638
        %v640 = vlaneseq
        %v641 = vshrl.u32 %v640, 7
        %v642 = vsub.s32 %v410, %v641
        %v643 = vrot.slane %v621, %v642
        %v644 = vlaneseq
        %v645 = vshrl.u32 %v644, 7
        %v646 = vsub.s32 %v410, %v645
        %v647 = vrot.slane %v624, %v646
        %v648 = vlaneseq
        %v649 = vshrl.u32 %v648, 7
        %v650 = vsub.s32 %v410, %v649
        %v651 = vrot.slane %v627, %v650
        %v652 = vlaneseq
        %v653 = vshrl.u32 %v652, 7
        %v654 = vsub.s32 %v410, %v653
        %v655 = vrot.slane %v630, %v654
        %v656 = vsel %vm431, %v643, %v639
        %v657 = vsel %vm433, %v647, %v656
        %v658 = vsel %vm435, %v651, %v657
        %v659 = vsel %vm437, %v655, %v658
        %v661 = vsel %vm440, %v659, 0.0
        %662 = vadd.xlane.f32.xlu0 %v661
        %v663 = vpop.xlane.xlu0 %662
        %vm664 = vcmask 36896
        %665 = vst.msk [vmem:[%s195] sm:$0x1f] %vm664, %v663
        %v666 = vld [vmem:[%s364] sm:$0x3]
        %v667 = vld [vmem:[%s364 + $0x2] sm:$0x3]
        %v668 = vld [vmem:[%s364 + $0x4] sm:$0x3]
        %v669 = vld [vmem:[%s364 + $0x6] sm:$0x3]
        %v670 = vld [vmem:[%s364 + $0x8] sm:$0x3]
        %v671 = vsel %vm388, %v666, 0.0
        %672 = vadd.xlane.f32.xlu0 %v671
        %v673 = vpop.xlane.xlu0 %672
        %v674 = vsel %vm388, %v667, 0.0
        %675 = vadd.xlane.f32.xlu0 %v674
        %v676 = vpop.xlane.xlu0 %675
        %v677 = vsel %vm388, %v668, 0.0
        %678 = vadd.xlane.f32.xlu0 %v677
        %v679 = vpop.xlane.xlu0 %678
        %v680 = vsel %vm388, %v669, 0.0
        %681 = vadd.xlane.f32.xlu0 %v680
        %v682 = vpop.xlane.xlu0 %681
        %v683 = vsel %vm388, %v670, 0.0
        %684 = vadd.xlane.f32.xlu0 %v683
        %v685 = vpop.xlane.xlu0 %684
        %v691 = vlaneseq
        %v692 = vshrl.u32 %v691, 7
        %v693 = vsub.s32 %v410, %v692
        %v694 = vrot.slane %v673, %v693
        %v695 = vlaneseq
        %v696 = vshrl.u32 %v695, 7
        %v697 = vsub.s32 %v410, %v696
        %v698 = vrot.slane %v676, %v697
        %v699 = vlaneseq
        %v700 = vshrl.u32 %v699, 7
        %v701 = vsub.s32 %v410, %v700
        %v702 = vrot.slane %v679, %v701
        %v703 = vlaneseq
        %v704 = vshrl.u32 %v703, 7
        %v705 = vsub.s32 %v410, %v704
        %v706 = vrot.slane %v682, %v705
        %v707 = vlaneseq
        %v708 = vshrl.u32 %v707, 7
        %v709 = vsub.s32 %v410, %v708
        %v710 = vrot.slane %v685, %v709
        %v711 = vsel %vm431, %v698, %v694
        %v712 = vsel %vm433, %v702, %v711
        %v713 = vsel %vm435, %v706, %v712
        %v714 = vsel %vm437, %v710, %v713
        %v716 = vsel %vm440, %v714, 0.0
        %717 = vadd.xlane.f32.xlu0 %v716
        %v718 = vpop.xlane.xlu0 %717
        %vm719 = vcmask 45096
        %720 = vst.msk [vmem:[%s195] sm:$0x1f] %vm719, %v718
      $region36: #{_loss_impl.3} parent=27 // pred_fallthru
        _
      %p721 = scmp.lt.s32.totalorder %s17, 1
      %s722 = scalar_select %p721, %s17, 1
      %s723 = smul.addr %s722, 8
      %s724 = scalar_lea.vmem %s2, %s723
      // Predicated region
      $region37: #{_loss_impl.3} parent=27 // pred_check
        %p725 = pneg %p99
      $region38: #{_loss_impl.3} parent=27 // pred_check_branch
        %727 = sbr.rel (%p725) target = $region40
      $region39: #{_loss_impl.3} parent=27 // pred_region
        _
      $region40: #{_loss_impl.3} parent=27 // pred_fallthru
        _
    $region28: #{_loss_impl.3} parent=5 // pred_fallthru
      _
    %p728 = scmp.le.s32.totalorder 2, %s8
    // Predicated region
    $region41: #{_loss_impl.3} parent=5 // pred_check
      %p729 = pneg %p728
    $region42: #{_loss_impl.3} parent=5 // pred_check_branch
      %731 = sbr.rel (%p729) target = $region44
    $region43: #{_loss_impl.3} parent=5 // pred_region
      %s732 = ssub.s32 %s8, 2
      // Predicated region
      $region45: #{_loss_impl.3} parent=43 // pred_check
        %p733 = pneg %p105
      $region46: #{_loss_impl.3} parent=43 // pred_check_branch
        %735 = sbr.rel (%p733) target = $region48
      $region47: #{_loss_impl.3} parent=43 // pred_region
        %p736 = scmp.lt.s32.totalorder %s19, 1
        %s737 = scalar_select %p736, %s19, 1
        %s738 = smul.addr %s737, 8
        %s739 = scalar_lea.vmem %s2, %s738
      $region48: #{_loss_impl.3} parent=43 // pred_fallthru
        _
    $region44: #{_loss_impl.3} parent=5 // pred_fallthru
      _
  $region6: #{_loss_impl.3} parent=0 // loop_footer
    %s12 = sadd.s32 1, %s8
  $region7: #{_loss_impl.3} parent=0 // loop_footer_branch
    %7 = sbr.rel target = $region3
  $region8: #{_loss_impl.3} parent=0 // loop_exit
    _

</llo_original>
